<compile_context>
chip_gen: v5e
topology: v5e:2x2
jax: 0.10.0
libtpu: 0.0.40
codegen_flags: <defaults>
</compile_context>

<pallas_src>
import functools

import jax
import jax.numpy as jnp
from jax.experimental import pallas as pl
from jax.experimental.pallas import tpu as pltpu

K = 7          # conv kernel size
P = K // 2     # "same" padding
KK = K * K
N_ACC = 4      # independent partial accumulators (break the VALU dep chain)


def spatial_attention_kernel(wmask_ref, x_ref, o_ref, sum_ref, max_ref, *,
                             W, HW, C, block_b):
    # wmask_ref: VMEM (KK, 2*block_b, HW) f32 -- conv weight * zero-pad mask,
    #            pre-stacked to the [avg-rows ; max-rows] sublane layout.
    # x_ref    : VMEM (block_b, block_c, HW)  -- batch/channel tile (lane-dense)
    # o_ref    : VMEM (block_b, HW)           -- attention map for this batch tile
    # sum_ref  : VMEM (block_b, HW) f32       -- running channel sum
    # max_ref  : VMEM (block_b, HW) f32       -- running channel max
    c = pl.program_id(1)

    x = x_ref[...].astype(jnp.float32)            # (Bb, Cb, HW)
    psum = jnp.sum(x, axis=1)                     # (Bb, HW)
    pmax = jnp.max(x, axis=1)                     # (Bb, HW)

    @pl.when(c == 0)
    def _():
        sum_ref[...] = psum
        max_ref[...] = pmax

    @pl.when(c > 0)
    def _():
        sum_ref[...] = sum_ref[...] + psum
        max_ref[...] = jnp.maximum(max_ref[...], pmax)

    @pl.when(c == pl.num_programs(1) - 1)
    def _():
        avg = sum_ref[...] * (1.0 / C)
        # Stack [avg ; max] along sublanes: one roll/mul/add per tap covers
        # both conv input channels.
        stacked = jnp.concatenate([avg, max_ref[...]], axis=0)   # (2*Bb, HW)

        accs = [jnp.zeros_like(stacked) for _ in range(N_ACC)]
        t = 0
        for kh in range(K):
            for kw in range(K):
                # tap(i,j) = plane[i+dy, j+dx] == roll(flat_plane, -(dy*W+dx));
                # out-of-image sources are zeroed by the folded mask.
                shift = (-((kh - P) * W + (kw - P))) % HW
                tap = pltpu.roll(stacked, shift, axis=1) if shift else stacked
                wm = wmask_ref[kh * K + kw]                      # (2*Bb, HW) load
                accs[t % N_ACC] = accs[t % N_ACC] + wm * tap
                t += 1

        acc = functools.reduce(lambda a, b: a + b, accs)
        res = acc[:block_b, :] + acc[block_b:, :]                # sum the 2 channels
        o_ref[...] = jax.nn.sigmoid(res).astype(o_ref.dtype)


def _stacked_weight_masks(weight, H, W, block_b):
    """Fold the (1,2,K,K) conv weight and the zero-padding validity into a
    (K*K, 2*block_b, H*W) table stacked to the kernel's [avg-rows ; max-rows]
    sublane layout:
      table[kh*K+kw, ci*block_b + r, i*W+j] =
        weight[0, ci, kh, kw] if (i+kh-P, j+kw-P) is inside the image else 0.
    """
    off = jnp.arange(K) - P
    i = jnp.arange(H)
    j = jnp.arange(W)
    row_ok = (i[None, :] + off[:, None] >= 0) & (i[None, :] + off[:, None] < H)   # (K,H)
    col_ok = (j[None, :] + off[:, None] >= 0) & (j[None, :] + off[:, None] < W)   # (K,W)
    valid = (row_ok[:, None, :, None] & col_ok[None, :, None, :]).astype(jnp.float32)  # (Kh,Kw,H,W)
    w = weight[0].astype(jnp.float32)                                # (2, K, K)
    wm = w[:, :, :, None, None] * valid[None]                        # (2,Kh,Kw,H,W)
    wm = wm.reshape(2, KK, H * W)                                    # (2,KK,HW)
    wm = jnp.broadcast_to(wm[:, :, None, :], (2, KK, block_b, H * W))  # (2,KK,Bb,HW)
    return jnp.transpose(wm, (1, 0, 2, 3)).reshape(KK, 2 * block_b, H * W)


def _vmem_limit_bytes():
    """Generation-aware scoped-VMEM limit: 96 MiB on 128-MiB chips (v5e/v6e),
    48 MiB on 64-MiB chips (v7x-class); conservative 48 MiB if unknown."""
    cap = 64 << 20
    try:
        info = pltpu.get_tpu_info()
        cap = int(getattr(info, "vmem_capacity_bytes", cap))
    except Exception:
        pass
    return int(min(max(cap - (16 << 20), 32 << 20), 96 << 20))


def _num_tensorcores():
    try:
        return max(1, int(getattr(jax.devices()[0], "num_cores", 1)))
    except Exception:
        return 1


def _divisors(n):
    return [d for d in range(1, n + 1) if n % d == 0]


def _pick_blocks(B, C, HW, itemsize, vmem_limit):
    """Pick (block_b, block_c).

    block_b must be == B or a multiple of 8 (legal (8,128) out block and
    sublane-dense vregs).  A >=2-step batch split is only preferred when each
    step keeps >= 8 batch rows AND the device has >1 TensorCore (megacore).
    block_c must be == C or a multiple-of-8 divisor of C; largest that fits.
    """
    budget = int(0.75 * vmem_limit)

    def fits(bb, bc):
        x_blk = bb * bc * HW * itemsize
        wm = KK * 2 * bb * HW * 4
        out_blk = bb * HW * itemsize
        scr = 2 * bb * HW * 4
        # inputs / outputs are double-buffered by the BlockSpec pipeline
        return 2 * x_blk + 2 * wm + 2 * out_blk + scr <= budget

    cand_b = [d for d in _divisors(B) if d == B or d % 8 == 0]
    cand_c = [d for d in _divisors(C) if d == C or d % 8 == 0]

    def best_c(bb):
        ok = [bc for bc in cand_c if fits(bb, bc)]
        return max(ok) if ok else None

    order = sorted(cand_b, reverse=True)
    if _num_tensorcores() > 1:
        # Prefer a >=2-step, still sublane-dense split for the 2-TC megacore.
        split = [d for d in order if d % 8 == 0 and d <= B // 2]
        order = split + [d for d in order if d not in split]

    for bb in order:
        bc = best_c(bb)
        if bc is not None:
            return bb, bc
    # Fallback: full blocks (tiny-problem case); compile will flag real OOM.
    return B, C


def spatial_attention(x, weight, *, block_b=None, block_c=None):
    """x: (B, C, H, W); weight: (1, 2, K, K) -> (B, 1, H, W) attention map."""
    B, C, H, W = x.shape
    HW = H * W
    itemsize = jnp.dtype(x.dtype).itemsize
    vmem_limit = _vmem_limit_bytes()

    auto_bb, auto_bc = _pick_blocks(B, C, HW, itemsize, vmem_limit)
    block_b = auto_bb if block_b is None else block_b
    block_c = auto_bc if block_c is None else block_c
    assert B % block_b == 0 and C % block_c == 0

    # Free, contiguous reshape in HBM: lane-dense (..., H*W) layout in/out.
    x_flat = x.reshape(B, C, HW)
    wmask = _stacked_weight_masks(weight, H, W, block_b)   # (KK, 2*block_b, HW) f32

    kernel = functools.partial(spatial_attention_kernel,
                               W=W, HW=HW, C=C, block_b=block_b)

    cost = pl.CostEstimate(
        flops=int(B * HW * (3 * C + 4 * KK)),          # mean/max + 49 taps x 2ch
        transcendentals=int(B * HW),                    # sigmoid
        bytes_accessed=int((B * C * HW + B * HW) * itemsize
                           + KK * 2 * block_b * HW * 4),
    )

    out_flat = pl.pallas_call(
        kernel,
        out_shape=jax.ShapeDtypeStruct((B, HW), x.dtype),
        grid_spec=pltpu.PrefetchScalarGridSpec(
            num_scalar_prefetch=0,
            grid=(B // block_b, C // block_c),          # channel reduction last
            in_specs=[
                # Invariant weight*mask table: constant index_map -> DMA'd once.
                # TODO(synk): pipeline_mode=pl.Buffered(1) would drop its second
                # VMEM buffer (matters most under v7x's 64 MiB); left at the
                # default buffering for portability.
                pl.BlockSpec((KK, 2 * block_b, HW), lambda b, c: (0, 0, 0)),
                pl.BlockSpec((block_b, block_c, HW), lambda b, c: (b, c, 0)),
            ],
            out_specs=pl.BlockSpec((block_b, HW), lambda b, c: (b, 0)),
            scratch_shapes=[
                pltpu.VMEM((block_b, HW), jnp.float32),   # running channel sum
                pltpu.VMEM((block_b, HW), jnp.float32),   # running channel max
            ],
        ),
        compiler_params=pltpu.CompilerParams(
            dimension_semantics=("parallel", "arbitrary"),
            vmem_limit_bytes=vmem_limit,
        ),
        cost_estimate=cost,
    )(wmask, x_flat)

    return out_flat.reshape(B, 1, H, W)


def reference(x, weight):
    avg = jnp.mean(x, axis=1, keepdims=True)
    mx = jnp.max(x, axis=1, keepdims=True)
    cat = jnp.concatenate([avg, mx], axis=1)
    y = jax.lax.conv_general_dilated(
        cat, weight, window_strides=(1, 1), padding=((P, P), (P, P)),
        dimension_numbers=("NCHW", "OIHW", "NCHW"))
    return jax.nn.sigmoid(y)


if __name__ == "__main__":
    key = jax.random.PRNGKey(0)
    kx, kwt = jax.random.split(key)

    B, C, H, Wd = 2, 4, 16, 16
    x = jax.random.normal(kx, (B, C, H, Wd), dtype=jnp.float32)
    # Deterministic conv weight (kaiming-ish scale), shape (out=1, in=2, K, K).
    weight = jax.random.normal(kwt, (1, 2, K, K), dtype=jnp.float32) * (1.0 / (2 * K * K) ** 0.5)

    out = jax.block_until_ready(spatial_attention(x, weight))
    ref = reference(x, weight)

    assert out.shape == (B, 1, H, Wd), out.shape
    assert jnp.allclose(out, ref, atol=1e-5, rtol=1e-5), float(jnp.max(jnp.abs(out - ref)))

    print("KERNEL_OK")
</pallas_src>

<mosaic_0001>
module attributes {stable_mosaic.version = 11 : i64} {
  func.func @spatial_attention_kernel(%arg0: i32, %arg1: i32, %arg2: memref<49x4x256xf32, #tpu.memory_space<vmem>>, %arg3: memref<2x4x256xf32, #tpu.memory_space<vmem>>, %arg4: memref<2x256xf32, #tpu.memory_space<vmem>>, %arg5: memref<2x256xf32, #tpu.memory_space<vmem>>, %arg6: memref<2x256xf32, #tpu.memory_space<vmem>>) attributes {dimension_semantics = [#tpu.dimension_semantics<parallel>, #tpu.dimension_semantics<arbitrary>], iteration_bounds = array<i64: 1, 1>, scalar_prefetch = 0 : i64, scratch_operands = 2 : i64, tpu.core_type = #tpu.core_type<tc>, window_params = [{pipeline_mode = #tpu.pipeline_mode<synchronous>, transform_indices = @transform_0, window_bounds = array<i64: 49, 4, 256>}, {transform_indices = @transform_1, window_bounds = array<i64: 2, 4, 256>}, {transform_indices = @transform_2, window_bounds = array<i64: 2, 256>}]} {
    %c0 = arith.constant 0 : index
    %c0_0 = arith.constant 0 : index
    %c0_1 = arith.constant 0 : index
    %0 = vector.load %arg3[%c0, %c0_0, %c0_1] : memref<2x4x256xf32, #tpu.memory_space<vmem>>, vector<2x4x256xf32>
    %cst = arith.constant dense<0.000000e+00> : vector<2x256xf32>
    %1 = vector.multi_reduction <add>, %0, %cst [1] : vector<2x4x256xf32> to vector<2x256xf32>
    %cst_2 = arith.constant dense<0xFF800000> : vector<2x256xf32>
    %2 = vector.multi_reduction <maximumf>, %0, %cst_2 [1] : vector<2x4x256xf32> to vector<2x256xf32>
    %c0_i32 = arith.constant 0 : i32
    %3 = arith.cmpi eq, %arg1, %c0_i32 : i32
    %4 = arith.extui %3 : i1 to i32
    %c0_i32_3 = arith.constant 0 : i32
    %5 = arith.cmpi ne, %4, %c0_i32_3 : i32
    scf.if %5 {
      %c0_8 = arith.constant 0 : index
      %c0_9 = arith.constant 0 : index
      %12 = vector.load %arg5[%c0_8, %c0_9] : memref<2x256xf32, #tpu.memory_space<vmem>>, vector<2x256xf32>
      tpu.vector_store %arg5[%c0_8, %c0_9], %1 {strides = array<i32>} : memref<2x256xf32, #tpu.memory_space<vmem>>, vector<2x256xf32>,
      %c0_10 = arith.constant 0 : index
      %c0_11 = arith.constant 0 : index
      %13 = vector.load %arg6[%c0_10, %c0_11] : memref<2x256xf32, #tpu.memory_space<vmem>>, vector<2x256xf32>
      tpu.vector_store %arg6[%c0_10, %c0_11], %2 {strides = array<i32>} : memref<2x256xf32, #tpu.memory_space<vmem>>, vector<2x256xf32>,
    } else {
    }
    %c0_i32_4 = arith.constant 0 : i32
    %6 = arith.cmpi sgt, %arg1, %c0_i32_4 : i32
    %7 = arith.extui %6 : i1 to i32
    %c0_i32_5 = arith.constant 0 : i32
    %8 = arith.cmpi ne, %7, %c0_i32_5 : i32
    scf.if %8 {
      %c0_8 = arith.constant 0 : index
      %c0_9 = arith.constant 0 : index
      %12 = vector.load %arg5[%c0_8, %c0_9] : memref<2x256xf32, #tpu.memory_space<vmem>>, vector<2x256xf32>
      %13 = arith.addf %12, %1 : vector<2x256xf32>
      %c0_10 = arith.constant 0 : index
      %c0_11 = arith.constant 0 : index
      %14 = vector.load %arg5[%c0_10, %c0_11] : memref<2x256xf32, #tpu.memory_space<vmem>>, vector<2x256xf32>
      tpu.vector_store %arg5[%c0_10, %c0_11], %13 {strides = array<i32>} : memref<2x256xf32, #tpu.memory_space<vmem>>, vector<2x256xf32>,
      %c0_12 = arith.constant 0 : index
      %c0_13 = arith.constant 0 : index
      %15 = vector.load %arg6[%c0_12, %c0_13] : memref<2x256xf32, #tpu.memory_space<vmem>>, vector<2x256xf32>
      %16 = arith.maximumf %15, %2 : vector<2x256xf32>
      %c0_14 = arith.constant 0 : index
      %c0_15 = arith.constant 0 : index
      %17 = vector.load %arg6[%c0_14, %c0_15] : memref<2x256xf32, #tpu.memory_space<vmem>>, vector<2x256xf32>
      tpu.vector_store %arg6[%c0_14, %c0_15], %16 {strides = array<i32>} : memref<2x256xf32, #tpu.memory_space<vmem>>, vector<2x256xf32>,
    } else {
    }
    %c0_i32_6 = arith.constant 0 : i32
    %9 = arith.cmpi eq, %arg1, %c0_i32_6 : i32
    %10 = arith.extui %9 : i1 to i32
    %c0_i32_7 = arith.constant 0 : i32
    %11 = arith.cmpi ne, %10, %c0_i32_7 : i32
    scf.if %11 {
      %c0_8 = arith.constant 0 : index
      %c0_9 = arith.constant 0 : index
      %12 = vector.load %arg5[%c0_8, %c0_9] : memref<2x256xf32, #tpu.memory_space<vmem>>, vector<2x256xf32>
      %cst_10 = arith.constant 2.500000e-01 : f32
      %13 = vector.broadcast %cst_10 : f32 to vector<2x256xf32>
      %14 = arith.mulf %12, %13 : vector<2x256xf32>
      %c0_11 = arith.constant 0 : index
      %c0_12 = arith.constant 0 : index
      %15 = vector.load %arg6[%c0_11, %c0_12] : memref<2x256xf32, #tpu.memory_space<vmem>>, vector<2x256xf32>
      %16 = tpu.concatenate %14, %15 in 0 : vector<2x256xf32>, vector<2x256xf32> -> vector<4x256xf32>
      %cst_13 = arith.constant 0.000000e+00 : f32
      %17 = vector.broadcast %cst_13 : f32 to vector<4x256xf32>
      %cst_14 = arith.constant 0.000000e+00 : f32
      %18 = vector.broadcast %cst_14 : f32 to vector<4x256xf32>
      %cst_15 = arith.constant 0.000000e+00 : f32
      %19 = vector.broadcast %cst_15 : f32 to vector<4x256xf32>
      %cst_16 = arith.constant 0.000000e+00 : f32
      %20 = vector.broadcast %cst_16 : f32 to vector<4x256xf32>
      %c51_i32 = arith.constant 51 : i32
      %21 = tpu.dynamic_rotate %16 by %c51_i32 dim 1 : vector<4x256xf32>, i32 -> vector<4x256xf32>
      %c0_17 = arith.constant 0 : index
      %c0_18 = arith.constant 0 : index
      %c0_19 = arith.constant 0 : index
      %22 = vector.load %arg2[%c0_17, %c0_18, %c0_19] : memref<49x4x256xf32, #tpu.memory_space<vmem>>, vector<1x4x256xf32>
      %23 = vector.shape_cast %22 : vector<1x4x256xf32> to vector<4x256xf32>
      %24 = arith.mulf %23, %21 : vector<4x256xf32>
      %25 = arith.addf %17, %24 : vector<4x256xf32>
      %c50_i32 = arith.constant 50 : i32
      %26 = tpu.dynamic_rotate %16 by %c50_i32 dim 1 : vector<4x256xf32>, i32 -> vector<4x256xf32>
      %c1 = arith.constant 1 : index
      %c0_20 = arith.constant 0 : index
      %c0_21 = arith.constant 0 : index
      %27 = vector.load %arg2[%c1, %c0_20, %c0_21] : memref<49x4x256xf32, #tpu.memory_space<vmem>>, vector<1x4x256xf32>
      %28 = vector.shape_cast %27 : vector<1x4x256xf32> to vector<4x256xf32>
      %29 = arith.mulf %28, %26 : vector<4x256xf32>
      %30 = arith.addf %18, %29 : vector<4x256xf32>
      %c49_i32 = arith.constant 49 : i32
      %31 = tpu.dynamic_rotate %16 by %c49_i32 dim 1 : vector<4x256xf32>, i32 -> vector<4x256xf32>
      %c2 = arith.constant 2 : index
      %c0_22 = arith.constant 0 : index
      %c0_23 = arith.constant 0 : index
      %32 = vector.load %arg2[%c2, %c0_22, %c0_23] : memref<49x4x256xf32, #tpu.memory_space<vmem>>, vector<1x4x256xf32>
      %33 = vector.shape_cast %32 : vector<1x4x256xf32> to vector<4x256xf32>
      %34 = arith.mulf %33, %31 : vector<4x256xf32>
      %35 = arith.addf %19, %34 : vector<4x256xf32>
      %c48_i32 = arith.constant 48 : i32
      %36 = tpu.dynamic_rotate %16 by %c48_i32 dim 1 : vector<4x256xf32>, i32 -> vector<4x256xf32>
      %c3 = arith.constant 3 : index
      %c0_24 = arith.constant 0 : index
      %c0_25 = arith.constant 0 : index
      %37 = vector.load %arg2[%c3, %c0_24, %c0_25] : memref<49x4x256xf32, #tpu.memory_space<vmem>>, vector<1x4x256xf32>
      %38 = vector.shape_cast %37 : vector<1x4x256xf32> to vector<4x256xf32>
      %39 = arith.mulf %38, %36 : vector<4x256xf32>
      %40 = arith.addf %20, %39 : vector<4x256xf32>
      %c47_i32 = arith.constant 47 : i32
      %41 = tpu.dynamic_rotate %16 by %c47_i32 dim 1 : vector<4x256xf32>, i32 -> vector<4x256xf32>
      %c4 = arith.constant 4 : index
      %c0_26 = arith.constant 0 : index
      %c0_27 = arith.constant 0 : index
      %42 = vector.load %arg2[%c4, %c0_26, %c0_27] : memref<49x4x256xf32, #tpu.memory_space<vmem>>, vector<1x4x256xf32>
      %43 = vector.shape_cast %42 : vector<1x4x256xf32> to vector<4x256xf32>
      %44 = arith.mulf %43, %41 : vector<4x256xf32>
      %45 = arith.addf %25, %44 : vector<4x256xf32>
      %c46_i32 = arith.constant 46 : i32
      %46 = tpu.dynamic_rotate %16 by %c46_i32 dim 1 : vector<4x256xf32>, i32 -> vector<4x256xf32>
      %c5 = arith.constant 5 : index
      %c0_28 = arith.constant 0 : index
      %c0_29 = arith.constant 0 : index
      %47 = vector.load %arg2[%c5, %c0_28, %c0_29] : memref<49x4x256xf32, #tpu.memory_space<vmem>>, vector<1x4x256xf32>
      %48 = vector.shape_cast %47 : vector<1x4x256xf32> to vector<4x256xf32>
      %49 = arith.mulf %48, %46 : vector<4x256xf32>
      %50 = arith.addf %30, %49 : vector<4x256xf32>
      %c45_i32 = arith.constant 45 : i32
      %51 = tpu.dynamic_rotate %16 by %c45_i32 dim 1 : vector<4x256xf32>, i32 -> vector<4x256xf32>
      %c6 = arith.constant 6 : index
      %c0_30 = arith.constant 0 : index
      %c0_31 = arith.constant 0 : index
      %52 = vector.load %arg2[%c6, %c0_30, %c0_31] : memref<49x4x256xf32, #tpu.memory_space<vmem>>, vector<1x4x256xf32>
      %53 = vector.shape_cast %52 : vector<1x4x256xf32> to vector<4x256xf32>
      %54 = arith.mulf %53, %51 : vector<4x256xf32>
      %55 = arith.addf %35, %54 : vector<4x256xf32>
      %c35_i32 = arith.constant 35 : i32
      %56 = tpu.dynamic_rotate %16 by %c35_i32 dim 1 : vector<4x256xf32>, i32 -> vector<4x256xf32>
      %c7 = arith.constant 7 : index
      %c0_32 = arith.constant 0 : index
      %c0_33 = arith.constant 0 : index
      %57 = vector.load %arg2[%c7, %c0_32, %c0_33] : memref<49x4x256xf32, #tpu.memory_space<vmem>>, vector<1x4x256xf32>
      %58 = vector.shape_cast %57 : vector<1x4x256xf32> to vector<4x256xf32>
      %59 = arith.mulf %58, %56 : vector<4x256xf32>
      %60 = arith.addf %40, %59 : vector<4x256xf32>
      %c34_i32 = arith.constant 34 : i32
      %61 = tpu.dynamic_rotate %16 by %c34_i32 dim 1 : vector<4x256xf32>, i32 -> vector<4x256xf32>
      %c8 = arith.constant 8 : index
      %c0_34 = arith.constant 0 : index
      %c0_35 = arith.constant 0 : index
      %62 = vector.load %arg2[%c8, %c0_34, %c0_35] : memref<49x4x256xf32, #tpu.memory_space<vmem>>, vector<1x4x256xf32>
      %63 = vector.shape_cast %62 : vector<1x4x256xf32> to vector<4x256xf32>
      %64 = arith.mulf %63, %61 : vector<4x256xf32>
      %65 = arith.addf %45, %64 : vector<4x256xf32>
      %c33_i32 = arith.constant 33 : i32
      %66 = tpu.dynamic_rotate %16 by %c33_i32 dim 1 : vector<4x256xf32>, i32 -> vector<4x256xf32>
      %c9 = arith.constant 9 : index
      %c0_36 = arith.constant 0 : index
      %c0_37 = arith.constant 0 : index
      %67 = vector.load %arg2[%c9, %c0_36, %c0_37] : memref<49x4x256xf32, #tpu.memory_space<vmem>>, vector<1x4x256xf32>
      %68 = vector.shape_cast %67 : vector<1x4x256xf32> to vector<4x256xf32>
      %69 = arith.mulf %68, %66 : vector<4x256xf32>
      %70 = arith.addf %50, %69 : vector<4x256xf32>
      %c32_i32 = arith.constant 32 : i32
      %71 = tpu.dynamic_rotate %16 by %c32_i32 dim 1 : vector<4x256xf32>, i32 -> vector<4x256xf32>
      %c10 = arith.constant 10 : index
      %c0_38 = arith.constant 0 : index
      %c0_39 = arith.constant 0 : index
      %72 = vector.load %arg2[%c10, %c0_38, %c0_39] : memref<49x4x256xf32, #tpu.memory_space<vmem>>, vector<1x4x256xf32>
      %73 = vector.shape_cast %72 : vector<1x4x256xf32> to vector<4x256xf32>
      %74 = arith.mulf %73, %71 : vector<4x256xf32>
      %75 = arith.addf %55, %74 : vector<4x256xf32>
      %c31_i32 = arith.constant 31 : i32
      %76 = tpu.dynamic_rotate %16 by %c31_i32 dim 1 : vector<4x256xf32>, i32 -> vector<4x256xf32>
      %c11 = arith.constant 11 : index
      %c0_40 = arith.constant 0 : index
      %c0_41 = arith.constant 0 : index
      %77 = vector.load %arg2[%c11, %c0_40, %c0_41] : memref<49x4x256xf32, #tpu.memory_space<vmem>>, vector<1x4x256xf32>
      %78 = vector.shape_cast %77 : vector<1x4x256xf32> to vector<4x256xf32>
      %79 = arith.mulf %78, %76 : vector<4x256xf32>
      %80 = arith.addf %60, %79 : vector<4x256xf32>
      %c30_i32 = arith.constant 30 : i32
      %81 = tpu.dynamic_rotate %16 by %c30_i32 dim 1 : vector<4x256xf32>, i32 -> vector<4x256xf32>
      %c12 = arith.constant 12 : index
      %c0_42 = arith.constant 0 : index
      %c0_43 = arith.constant 0 : index
      %82 = vector.load %arg2[%c12, %c0_42, %c0_43] : memref<49x4x256xf32, #tpu.memory_space<vmem>>, vector<1x4x256xf32>
      %83 = vector.shape_cast %82 : vector<1x4x256xf32> to vector<4x256xf32>
      %84 = arith.mulf %83, %81 : vector<4x256xf32>
      %85 = arith.addf %65, %84 : vector<4x256xf32>
      %c29_i32 = arith.constant 29 : i32
      %86 = tpu.dynamic_rotate %16 by %c29_i32 dim 1 : vector<4x256xf32>, i32 -> vector<4x256xf32>
      %c13 = arith.constant 13 : index
      %c0_44 = arith.constant 0 : index
      %c0_45 = arith.constant 0 : index
      %87 = vector.load %arg2[%c13, %c0_44, %c0_45] : memref<49x4x256xf32, #tpu.memory_space<vmem>>, vector<1x4x256xf32>
      %88 = vector.shape_cast %87 : vector<1x4x256xf32> to vector<4x256xf32>
      %89 = arith.mulf %88, %86 : vector<4x256xf32>
      %90 = arith.addf %70, %89 : vector<4x256xf32>
      %c19_i32 = arith.constant 19 : i32
      %91 = tpu.dynamic_rotate %16 by %c19_i32 dim 1 : vector<4x256xf32>, i32 -> vector<4x256xf32>
      %c14 = arith.constant 14 : index
      %c0_46 = arith.constant 0 : index
      %c0_47 = arith.constant 0 : index
      %92 = vector.load %arg2[%c14, %c0_46, %c0_47] : memref<49x4x256xf32, #tpu.memory_space<vmem>>, vector<1x4x256xf32>
      %93 = vector.shape_cast %92 : vector<1x4x256xf32> to vector<4x256xf32>
      %94 = arith.mulf %93, %91 : vector<4x256xf32>
      %95 = arith.addf %75, %94 : vector<4x256xf32>
      %c18_i32 = arith.constant 18 : i32
      %96 = tpu.dynamic_rotate %16 by %c18_i32 dim 1 : vector<4x256xf32>, i32 -> vector<4x256xf32>
      %c15 = arith.constant 15 : index
      %c0_48 = arith.constant 0 : index
      %c0_49 = arith.constant 0 : index
      %97 = vector.load %arg2[%c15, %c0_48, %c0_49] : memref<49x4x256xf32, #tpu.memory_space<vmem>>, vector<1x4x256xf32>
      %98 = vector.shape_cast %97 : vector<1x4x256xf32> to vector<4x256xf32>
      %99 = arith.mulf %98, %96 : vector<4x256xf32>
      %100 = arith.addf %80, %99 : vector<4x256xf32>
      %c17_i32 = arith.constant 17 : i32
      %101 = tpu.dynamic_rotate %16 by %c17_i32 dim 1 : vector<4x256xf32>, i32 -> vector<4x256xf32>
      %c16 = arith.constant 16 : index
      %c0_50 = arith.constant 0 : index
      %c0_51 = arith.constant 0 : index
      %102 = vector.load %arg2[%c16, %c0_50, %c0_51] : memref<49x4x256xf32, #tpu.memory_space<vmem>>, vector<1x4x256xf32>
      %103 = vector.shape_cast %102 : vector<1x4x256xf32> to vector<4x256xf32>
      %104 = arith.mulf %103, %101 : vector<4x256xf32>
      %105 = arith.addf %85, %104 : vector<4x256xf32>
      %c16_i32 = arith.constant 16 : i32
      %106 = tpu.dynamic_rotate %16 by %c16_i32 dim 1 : vector<4x256xf32>, i32 -> vector<4x256xf32>
      %c17 = arith.constant 17 : index
      %c0_52 = arith.constant 0 : index
      %c0_53 = arith.constant 0 : index
      %107 = vector.load %arg2[%c17, %c0_52, %c0_53] : memref<49x4x256xf32, #tpu.memory_space<vmem>>, vector<1x4x256xf32>
      %108 = vector.shape_cast %107 : vector<1x4x256xf32> to vector<4x256xf32>
      %109 = arith.mulf %108, %106 : vector<4x256xf32>
      %110 = arith.addf %90, %109 : vector<4x256xf32>
      %c15_i32 = arith.constant 15 : i32
      %111 = tpu.dynamic_rotate %16 by %c15_i32 dim 1 : vector<4x256xf32>, i32 -> vector<4x256xf32>
      %c18 = arith.constant 18 : index
      %c0_54 = arith.constant 0 : index
      %c0_55 = arith.constant 0 : index
      %112 = vector.load %arg2[%c18, %c0_54, %c0_55] : memref<49x4x256xf32, #tpu.memory_space<vmem>>, vector<1x4x256xf32>
      %113 = vector.shape_cast %112 : vector<1x4x256xf32> to vector<4x256xf32>
      %114 = arith.mulf %113, %111 : vector<4x256xf32>
      %115 = arith.addf %95, %114 : vector<4x256xf32>
      %c14_i32 = arith.constant 14 : i32
      %116 = tpu.dynamic_rotate %16 by %c14_i32 dim 1 : vector<4x256xf32>, i32 -> vector<4x256xf32>
      %c19 = arith.constant 19 : index
      %c0_56 = arith.constant 0 : index
      %c0_57 = arith.constant 0 : index
      %117 = vector.load %arg2[%c19, %c0_56, %c0_57] : memref<49x4x256xf32, #tpu.memory_space<vmem>>, vector<1x4x256xf32>
      %118 = vector.shape_cast %117 : vector<1x4x256xf32> to vector<4x256xf32>
      %119 = arith.mulf %118, %116 : vector<4x256xf32>
      %120 = arith.addf %100, %119 : vector<4x256xf32>
      %c13_i32 = arith.constant 13 : i32
      %121 = tpu.dynamic_rotate %16 by %c13_i32 dim 1 : vector<4x256xf32>, i32 -> vector<4x256xf32>
      %c20 = arith.constant 20 : index
      %c0_58 = arith.constant 0 : index
      %c0_59 = arith.constant 0 : index
      %122 = vector.load %arg2[%c20, %c0_58, %c0_59] : memref<49x4x256xf32, #tpu.memory_space<vmem>>, vector<1x4x256xf32>
      %123 = vector.shape_cast %122 : vector<1x4x256xf32> to vector<4x256xf32>
      %124 = arith.mulf %123, %121 : vector<4x256xf32>
      %125 = arith.addf %105, %124 : vector<4x256xf32>
      %c3_i32 = arith.constant 3 : i32
      %126 = tpu.dynamic_rotate %16 by %c3_i32 dim 1 : vector<4x256xf32>, i32 -> vector<4x256xf32>
      %c21 = arith.constant 21 : index
      %c0_60 = arith.constant 0 : index
      %c0_61 = arith.constant 0 : index
      %127 = vector.load %arg2[%c21, %c0_60, %c0_61] : memref<49x4x256xf32, #tpu.memory_space<vmem>>, vector<1x4x256xf32>
      %128 = vector.shape_cast %127 : vector<1x4x256xf32> to vector<4x256xf32>
      %129 = arith.mulf %128, %126 : vector<4x256xf32>
      %130 = arith.addf %110, %129 : vector<4x256xf32>
      %c2_i32 = arith.constant 2 : i32
      %131 = tpu.dynamic_rotate %16 by %c2_i32 dim 1 : vector<4x256xf32>, i32 -> vector<4x256xf32>
      %c22 = arith.constant 22 : index
      %c0_62 = arith.constant 0 : index
      %c0_63 = arith.constant 0 : index
      %132 = vector.load %arg2[%c22, %c0_62, %c0_63] : memref<49x4x256xf32, #tpu.memory_space<vmem>>, vector<1x4x256xf32>
      %133 = vector.shape_cast %132 : vector<1x4x256xf32> to vector<4x256xf32>
      %134 = arith.mulf %133, %131 : vector<4x256xf32>
      %135 = arith.addf %115, %134 : vector<4x256xf32>
      %c1_i32 = arith.constant 1 : i32
      %136 = tpu.dynamic_rotate %16 by %c1_i32 dim 1 : vector<4x256xf32>, i32 -> vector<4x256xf32>
      %c23 = arith.constant 23 : index
      %c0_64 = arith.constant 0 : index
      %c0_65 = arith.constant 0 : index
      %137 = vector.load %arg2[%c23, %c0_64, %c0_65] : memref<49x4x256xf32, #tpu.memory_space<vmem>>, vector<1x4x256xf32>
      %138 = vector.shape_cast %137 : vector<1x4x256xf32> to vector<4x256xf32>
      %139 = arith.mulf %138, %136 : vector<4x256xf32>
      %140 = arith.addf %120, %139 : vector<4x256xf32>
      %c24 = arith.constant 24 : index
      %c0_66 = arith.constant 0 : index
      %c0_67 = arith.constant 0 : index
      %141 = vector.load %arg2[%c24, %c0_66, %c0_67] : memref<49x4x256xf32, #tpu.memory_space<vmem>>, vector<1x4x256xf32>
      %142 = vector.shape_cast %141 : vector<1x4x256xf32> to vector<4x256xf32>
      %143 = arith.mulf %142, %16 : vector<4x256xf32>
      %144 = arith.addf %125, %143 : vector<4x256xf32>
      %c255_i32 = arith.constant 255 : i32
      %145 = tpu.dynamic_rotate %16 by %c255_i32 dim 1 : vector<4x256xf32>, i32 -> vector<4x256xf32>
      %c25 = arith.constant 25 : index
      %c0_68 = arith.constant 0 : index
      %c0_69 = arith.constant 0 : index
      %146 = vector.load %arg2[%c25, %c0_68, %c0_69] : memref<49x4x256xf32, #tpu.memory_space<vmem>>, vector<1x4x256xf32>
      %147 = vector.shape_cast %146 : vector<1x4x256xf32> to vector<4x256xf32>
      %148 = arith.mulf %147, %145 : vector<4x256xf32>
      %149 = arith.addf %130, %148 : vector<4x256xf32>
      %c254_i32 = arith.constant 254 : i32
      %150 = tpu.dynamic_rotate %16 by %c254_i32 dim 1 : vector<4x256xf32>, i32 -> vector<4x256xf32>
      %c26 = arith.constant 26 : index
      %c0_70 = arith.constant 0 : index
      %c0_71 = arith.constant 0 : index
      %151 = vector.load %arg2[%c26, %c0_70, %c0_71] : memref<49x4x256xf32, #tpu.memory_space<vmem>>, vector<1x4x256xf32>
      %152 = vector.shape_cast %151 : vector<1x4x256xf32> to vector<4x256xf32>
      %153 = arith.mulf %152, %150 : vector<4x256xf32>
      %154 = arith.addf %135, %153 : vector<4x256xf32>
      %c253_i32 = arith.constant 253 : i32
      %155 = tpu.dynamic_rotate %16 by %c253_i32 dim 1 : vector<4x256xf32>, i32 -> vector<4x256xf32>
      %c27 = arith.constant 27 : index
      %c0_72 = arith.constant 0 : index
      %c0_73 = arith.constant 0 : index
      %156 = vector.load %arg2[%c27, %c0_72, %c0_73] : memref<49x4x256xf32, #tpu.memory_space<vmem>>, vector<1x4x256xf32>
      %157 = vector.shape_cast %156 : vector<1x4x256xf32> to vector<4x256xf32>
      %158 = arith.mulf %157, %155 : vector<4x256xf32>
      %159 = arith.addf %140, %158 : vector<4x256xf32>
      %c243_i32 = arith.constant 243 : i32
      %160 = tpu.dynamic_rotate %16 by %c243_i32 dim 1 : vector<4x256xf32>, i32 -> vector<4x256xf32>
      %c28 = arith.constant 28 : index
      %c0_74 = arith.constant 0 : index
      %c0_75 = arith.constant 0 : index
      %161 = vector.load %arg2[%c28, %c0_74, %c0_75] : memref<49x4x256xf32, #tpu.memory_space<vmem>>, vector<1x4x256xf32>
      %162 = vector.shape_cast %161 : vector<1x4x256xf32> to vector<4x256xf32>
      %163 = arith.mulf %162, %160 : vector<4x256xf32>
      %164 = arith.addf %144, %163 : vector<4x256xf32>
      %c242_i32 = arith.constant 242 : i32
      %165 = tpu.dynamic_rotate %16 by %c242_i32 dim 1 : vector<4x256xf32>, i32 -> vector<4x256xf32>
      %c29 = arith.constant 29 : index
      %c0_76 = arith.constant 0 : index
      %c0_77 = arith.constant 0 : index
      %166 = vector.load %arg2[%c29, %c0_76, %c0_77] : memref<49x4x256xf32, #tpu.memory_space<vmem>>, vector<1x4x256xf32>
      %167 = vector.shape_cast %166 : vector<1x4x256xf32> to vector<4x256xf32>
      %168 = arith.mulf %167, %165 : vector<4x256xf32>
      %169 = arith.addf %149, %168 : vector<4x256xf32>
      %c241_i32 = arith.constant 241 : i32
      %170 = tpu.dynamic_rotate %16 by %c241_i32 dim 1 : vector<4x256xf32>, i32 -> vector<4x256xf32>
      %c30 = arith.constant 30 : index
      %c0_78 = arith.constant 0 : index
      %c0_79 = arith.constant 0 : index
      %171 = vector.load %arg2[%c30, %c0_78, %c0_79] : memref<49x4x256xf32, #tpu.memory_space<vmem>>, vector<1x4x256xf32>
      %172 = vector.shape_cast %171 : vector<1x4x256xf32> to vector<4x256xf32>
      %173 = arith.mulf %172, %170 : vector<4x256xf32>
      %174 = arith.addf %154, %173 : vector<4x256xf32>
      %c240_i32 = arith.constant 240 : i32
      %175 = tpu.dynamic_rotate %16 by %c240_i32 dim 1 : vector<4x256xf32>, i32 -> vector<4x256xf32>
      %c31 = arith.constant 31 : index
      %c0_80 = arith.constant 0 : index
      %c0_81 = arith.constant 0 : index
      %176 = vector.load %arg2[%c31, %c0_80, %c0_81] : memref<49x4x256xf32, #tpu.memory_space<vmem>>, vector<1x4x256xf32>
      %177 = vector.shape_cast %176 : vector<1x4x256xf32> to vector<4x256xf32>
      %178 = arith.mulf %177, %175 : vector<4x256xf32>
      %179 = arith.addf %159, %178 : vector<4x256xf32>
      %c239_i32 = arith.constant 239 : i32
      %180 = tpu.dynamic_rotate %16 by %c239_i32 dim 1 : vector<4x256xf32>, i32 -> vector<4x256xf32>
      %c32 = arith.constant 32 : index
      %c0_82 = arith.constant 0 : index
      %c0_83 = arith.constant 0 : index
      %181 = vector.load %arg2[%c32, %c0_82, %c0_83] : memref<49x4x256xf32, #tpu.memory_space<vmem>>, vector<1x4x256xf32>
      %182 = vector.shape_cast %181 : vector<1x4x256xf32> to vector<4x256xf32>
      %183 = arith.mulf %182, %180 : vector<4x256xf32>
      %184 = arith.addf %164, %183 : vector<4x256xf32>
      %c238_i32 = arith.constant 238 : i32
      %185 = tpu.dynamic_rotate %16 by %c238_i32 dim 1 : vector<4x256xf32>, i32 -> vector<4x256xf32>
      %c33 = arith.constant 33 : index
      %c0_84 = arith.constant 0 : index
      %c0_85 = arith.constant 0 : index
      %186 = vector.load %arg2[%c33, %c0_84, %c0_85] : memref<49x4x256xf32, #tpu.memory_space<vmem>>, vector<1x4x256xf32>
      %187 = vector.shape_cast %186 : vector<1x4x256xf32> to vector<4x256xf32>
      %188 = arith.mulf %187, %185 : vector<4x256xf32>
      %189 = arith.addf %169, %188 : vector<4x256xf32>
      %c237_i32 = arith.constant 237 : i32
      %190 = tpu.dynamic_rotate %16 by %c237_i32 dim 1 : vector<4x256xf32>, i32 -> vector<4x256xf32>
      %c34 = arith.constant 34 : index
      %c0_86 = arith.constant 0 : index
      %c0_87 = arith.constant 0 : index
      %191 = vector.load %arg2[%c34, %c0_86, %c0_87] : memref<49x4x256xf32, #tpu.memory_space<vmem>>, vector<1x4x256xf32>
      %192 = vector.shape_cast %191 : vector<1x4x256xf32> to vector<4x256xf32>
      %193 = arith.mulf %192, %190 : vector<4x256xf32>
      %194 = arith.addf %174, %193 : vector<4x256xf32>
      %c227_i32 = arith.constant 227 : i32
      %195 = tpu.dynamic_rotate %16 by %c227_i32 dim 1 : vector<4x256xf32>, i32 -> vector<4x256xf32>
      %c35 = arith.constant 35 : index
      %c0_88 = arith.constant 0 : index
      %c0_89 = arith.constant 0 : index
      %196 = vector.load %arg2[%c35, %c0_88, %c0_89] : memref<49x4x256xf32, #tpu.memory_space<vmem>>, vector<1x4x256xf32>
      %197 = vector.shape_cast %196 : vector<1x4x256xf32> to vector<4x256xf32>
      %198 = arith.mulf %197, %195 : vector<4x256xf32>
      %199 = arith.addf %179, %198 : vector<4x256xf32>
      %c226_i32 = arith.constant 226 : i32
      %200 = tpu.dynamic_rotate %16 by %c226_i32 dim 1 : vector<4x256xf32>, i32 -> vector<4x256xf32>
      %c36 = arith.constant 36 : index
      %c0_90 = arith.constant 0 : index
      %c0_91 = arith.constant 0 : index
      %201 = vector.load %arg2[%c36, %c0_90, %c0_91] : memref<49x4x256xf32, #tpu.memory_space<vmem>>, vector<1x4x256xf32>
      %202 = vector.shape_cast %201 : vector<1x4x256xf32> to vector<4x256xf32>
      %203 = arith.mulf %202, %200 : vector<4x256xf32>
      %204 = arith.addf %184, %203 : vector<4x256xf32>
      %c225_i32 = arith.constant 225 : i32
      %205 = tpu.dynamic_rotate %16 by %c225_i32 dim 1 : vector<4x256xf32>, i32 -> vector<4x256xf32>
      %c37 = arith.constant 37 : index
      %c0_92 = arith.constant 0 : index
      %c0_93 = arith.constant 0 : index
      %206 = vector.load %arg2[%c37, %c0_92, %c0_93] : memref<49x4x256xf32, #tpu.memory_space<vmem>>, vector<1x4x256xf32>
      %207 = vector.shape_cast %206 : vector<1x4x256xf32> to vector<4x256xf32>
      %208 = arith.mulf %207, %205 : vector<4x256xf32>
      %209 = arith.addf %189, %208 : vector<4x256xf32>
      %c224_i32 = arith.constant 224 : i32
      %210 = tpu.dynamic_rotate %16 by %c224_i32 dim 1 : vector<4x256xf32>, i32 -> vector<4x256xf32>
      %c38 = arith.constant 38 : index
      %c0_94 = arith.constant 0 : index
      %c0_95 = arith.constant 0 : index
      %211 = vector.load %arg2[%c38, %c0_94, %c0_95] : memref<49x4x256xf32, #tpu.memory_space<vmem>>, vector<1x4x256xf32>
      %212 = vector.shape_cast %211 : vector<1x4x256xf32> to vector<4x256xf32>
      %213 = arith.mulf %212, %210 : vector<4x256xf32>
      %214 = arith.addf %194, %213 : vector<4x256xf32>
      %c223_i32 = arith.constant 223 : i32
      %215 = tpu.dynamic_rotate %16 by %c223_i32 dim 1 : vector<4x256xf32>, i32 -> vector<4x256xf32>
      %c39 = arith.constant 39 : index
      %c0_96 = arith.constant 0 : index
      %c0_97 = arith.constant 0 : index
      %216 = vector.load %arg2[%c39, %c0_96, %c0_97] : memref<49x4x256xf32, #tpu.memory_space<vmem>>, vector<1x4x256xf32>
      %217 = vector.shape_cast %216 : vector<1x4x256xf32> to vector<4x256xf32>
      %218 = arith.mulf %217, %215 : vector<4x256xf32>
      %219 = arith.addf %199, %218 : vector<4x256xf32>
      %c222_i32 = arith.constant 222 : i32
      %220 = tpu.dynamic_rotate %16 by %c222_i32 dim 1 : vector<4x256xf32>, i32 -> vector<4x256xf32>
      %c40 = arith.constant 40 : index
      %c0_98 = arith.constant 0 : index
      %c0_99 = arith.constant 0 : index
      %221 = vector.load %arg2[%c40, %c0_98, %c0_99] : memref<49x4x256xf32, #tpu.memory_space<vmem>>, vector<1x4x256xf32>
      %222 = vector.shape_cast %221 : vector<1x4x256xf32> to vector<4x256xf32>
      %223 = arith.mulf %222, %220 : vector<4x256xf32>
      %224 = arith.addf %204, %223 : vector<4x256xf32>
      %c221_i32 = arith.constant 221 : i32
      %225 = tpu.dynamic_rotate %16 by %c221_i32 dim 1 : vector<4x256xf32>, i32 -> vector<4x256xf32>
      %c41 = arith.constant 41 : index
      %c0_100 = arith.constant 0 : index
      %c0_101 = arith.constant 0 : index
      %226 = vector.load %arg2[%c41, %c0_100, %c0_101] : memref<49x4x256xf32, #tpu.memory_space<vmem>>, vector<1x4x256xf32>
      %227 = vector.shape_cast %226 : vector<1x4x256xf32> to vector<4x256xf32>
      %228 = arith.mulf %227, %225 : vector<4x256xf32>
      %229 = arith.addf %209, %228 : vector<4x256xf32>
      %c211_i32 = arith.constant 211 : i32
      %230 = tpu.dynamic_rotate %16 by %c211_i32 dim 1 : vector<4x256xf32>, i32 -> vector<4x256xf32>
      %c42 = arith.constant 42 : index
      %c0_102 = arith.constant 0 : index
      %c0_103 = arith.constant 0 : index
      %231 = vector.load %arg2[%c42, %c0_102, %c0_103] : memref<49x4x256xf32, #tpu.memory_space<vmem>>, vector<1x4x256xf32>
      %232 = vector.shape_cast %231 : vector<1x4x256xf32> to vector<4x256xf32>
      %233 = arith.mulf %232, %230 : vector<4x256xf32>
      %234 = arith.addf %214, %233 : vector<4x256xf32>
      %c210_i32 = arith.constant 210 : i32
      %235 = tpu.dynamic_rotate %16 by %c210_i32 dim 1 : vector<4x256xf32>, i32 -> vector<4x256xf32>
      %c43 = arith.constant 43 : index
      %c0_104 = arith.constant 0 : index
      %c0_105 = arith.constant 0 : index
      %236 = vector.load %arg2[%c43, %c0_104, %c0_105] : memref<49x4x256xf32, #tpu.memory_space<vmem>>, vector<1x4x256xf32>
      %237 = vector.shape_cast %236 : vector<1x4x256xf32> to vector<4x256xf32>
      %238 = arith.mulf %237, %235 : vector<4x256xf32>
      %239 = arith.addf %219, %238 : vector<4x256xf32>
      %c209_i32 = arith.constant 209 : i32
      %240 = tpu.dynamic_rotate %16 by %c209_i32 dim 1 : vector<4x256xf32>, i32 -> vector<4x256xf32>
      %c44 = arith.constant 44 : index
      %c0_106 = arith.constant 0 : index
      %c0_107 = arith.constant 0 : index
      %241 = vector.load %arg2[%c44, %c0_106, %c0_107] : memref<49x4x256xf32, #tpu.memory_space<vmem>>, vector<1x4x256xf32>
      %242 = vector.shape_cast %241 : vector<1x4x256xf32> to vector<4x256xf32>
      %243 = arith.mulf %242, %240 : vector<4x256xf32>
      %244 = arith.addf %224, %243 : vector<4x256xf32>
      %c208_i32 = arith.constant 208 : i32
      %245 = tpu.dynamic_rotate %16 by %c208_i32 dim 1 : vector<4x256xf32>, i32 -> vector<4x256xf32>
      %c45 = arith.constant 45 : index
      %c0_108 = arith.constant 0 : index
      %c0_109 = arith.constant 0 : index
      %246 = vector.load %arg2[%c45, %c0_108, %c0_109] : memref<49x4x256xf32, #tpu.memory_space<vmem>>, vector<1x4x256xf32>
      %247 = vector.shape_cast %246 : vector<1x4x256xf32> to vector<4x256xf32>
      %248 = arith.mulf %247, %245 : vector<4x256xf32>
      %249 = arith.addf %229, %248 : vector<4x256xf32>
      %c207_i32 = arith.constant 207 : i32
      %250 = tpu.dynamic_rotate %16 by %c207_i32 dim 1 : vector<4x256xf32>, i32 -> vector<4x256xf32>
      %c46 = arith.constant 46 : index
      %c0_110 = arith.constant 0 : index
      %c0_111 = arith.constant 0 : index
      %251 = vector.load %arg2[%c46, %c0_110, %c0_111] : memref<49x4x256xf32, #tpu.memory_space<vmem>>, vector<1x4x256xf32>
      %252 = vector.shape_cast %251 : vector<1x4x256xf32> to vector<4x256xf32>
      %253 = arith.mulf %252, %250 : vector<4x256xf32>
      %254 = arith.addf %234, %253 : vector<4x256xf32>
      %c206_i32 = arith.constant 206 : i32
      %255 = tpu.dynamic_rotate %16 by %c206_i32 dim 1 : vector<4x256xf32>, i32 -> vector<4x256xf32>
      %c47 = arith.constant 47 : index
      %c0_112 = arith.constant 0 : index
      %c0_113 = arith.constant 0 : index
      %256 = vector.load %arg2[%c47, %c0_112, %c0_113] : memref<49x4x256xf32, #tpu.memory_space<vmem>>, vector<1x4x256xf32>
      %257 = vector.shape_cast %256 : vector<1x4x256xf32> to vector<4x256xf32>
      %258 = arith.mulf %257, %255 : vector<4x256xf32>
      %259 = arith.addf %239, %258 : vector<4x256xf32>
      %c205_i32 = arith.constant 205 : i32
      %260 = tpu.dynamic_rotate %16 by %c205_i32 dim 1 : vector<4x256xf32>, i32 -> vector<4x256xf32>
      %c48 = arith.constant 48 : index
      %c0_114 = arith.constant 0 : index
      %c0_115 = arith.constant 0 : index
      %261 = vector.load %arg2[%c48, %c0_114, %c0_115] : memref<49x4x256xf32, #tpu.memory_space<vmem>>, vector<1x4x256xf32>
      %262 = vector.shape_cast %261 : vector<1x4x256xf32> to vector<4x256xf32>
      %263 = arith.mulf %262, %260 : vector<4x256xf32>
      %264 = arith.addf %244, %263 : vector<4x256xf32>
      %265 = arith.addf %264, %249 : vector<4x256xf32>
      %266 = arith.addf %265, %254 : vector<4x256xf32>
      %267 = arith.addf %266, %259 : vector<4x256xf32>
      %268 = vector.extract_strided_slice %267 {offsets = [0, 0], sizes = [2, 256], strides = [1, 1]} : vector<4x256xf32> to vector<2x256xf32>
      %269 = vector.extract_strided_slice %267 {offsets = [2, 0], sizes = [2, 256], strides = [1, 1]} : vector<4x256xf32> to vector<2x256xf32>
      %270 = arith.addf %268, %269 : vector<2x256xf32>
      %271 = arith.negf %270 : vector<2x256xf32>
      %272 = math.exp %271 : vector<2x256xf32>
      %cst_116 = arith.constant 1.000000e+00 : f32
      %273 = vector.broadcast %cst_116 : f32 to vector<2x256xf32>
      %274 = arith.addf %273, %272 : vector<2x256xf32>
      %275 = arith.divf %273, %274 : vector<2x256xf32>
      %c0_117 = arith.constant 0 : index
      %c0_118 = arith.constant 0 : index
      %276 = vector.load %arg4[%c0_117, %c0_118] : memref<2x256xf32, #tpu.memory_space<vmem>>, vector<2x256xf32>
      tpu.vector_store %arg4[%c0_117, %c0_118], %275 {strides = array<i32>} : memref<2x256xf32, #tpu.memory_space<vmem>>, vector<2x256xf32>,
    } else {
    }
    return
  }
  func.func @transform_0(%arg0: i32, %arg1: i32) -> (i32, i32, i32) {
    %c0_i32 = arith.constant 0 : i32
    %c0_i32_0 = arith.constant 0 : i32
    %c0_i32_1 = arith.constant 0 : i32
    %c0_i32_2 = arith.constant 0 : i32
    return %c0_i32, %c0_i32_0, %c0_i32_1 : i32, i32, i32
  }
  func.func @transform_1(%arg0: i32, %arg1: i32) -> (i32, i32, i32) {
    %c0_i32 = arith.constant 0 : i32
    %c0_i32_0 = arith.constant 0 : i32
    return %arg0, %arg1, %c0_i32 : i32, i32, i32
  }
  func.func @transform_2(%arg0: i32, %arg1: i32) -> (i32, i32) {
    %c0_i32 = arith.constant 0 : i32
    %c0_i32_0 = arith.constant 0 : i32
    return %arg0, %c0_i32 : i32, i32
  }
}

</mosaic_0001>

<llo_original>
// kernel: tpu_custom_call.1
$region0: #{tpu_custom_call.1}
  #allocation0 [shape = 'u32[]', space=smem, size = 0x4, offset = 0x4, fixed_abs, tag = 'smem constant byte address 0x4 - core index']
  #allocation1 [shape = 'u32[72,128]{1,0:T(1,128)}', space=vmem, size = 0x9000, scoped, tag = 'internal scratch']
  #allocation2 [shape = 'f32[2,256]{1,0:T(2,128)}', space=vmem, size = 0x800, scoped, tag = 'scratch operand']
  #allocation3 [shape = 'f32[2,256]{1,0:T(2,128)}', space=vmem, size = 0x800, scoped, tag = 'scratch operand']
  %s0 = inlined_call_operand.hbm [shape: f32[49,4,256], index: 0, kind: input, shape index: {}]
  %s1 = inlined_call_operand.hbm [shape: f32[2,4,256], index: 1, kind: input, shape index: {}]
  %s2 = inlined_call_operand.hbm [shape: f32[2,256], index: 2, kind: output, shape index: {}]
  %s3 = sld [smem:[#allocation0]]
  $region38: #{tpu_custom_call.1} parent=0
    _
  %s5 = ssub.s32 1, %s3
  %s6 = scalar_select 0, %s5, %s3
  $region1: #{tpu_custom_call.1} parent=0
    #allocation4 [shape = 'u8[200704]{0}', space=vmem, size = 0x31000, scoped, tag = 'input window, operand 0, single buffered']
    #allocation5 [shape = 's32[1]{0}', space=sflag, size = 0x4, scoped, tag = 'scoped memory for tpu_custom_call.1']
    #allocation6 [shape = 's32[1]{0}', space=sflag, size = 0x4, scoped, tag = 'scoped memory for tpu_custom_call.1']
    #allocation7 [shape = 'u8[8192]{0}', space=vmem, size = 0x2000, scoped, tag = 'input window, operand 1, single buffered']
    #allocation8 [shape = 's32[1]{0}', space=sflag, size = 0x4, scoped, tag = 'scoped memory for tpu_custom_call.1']
    #allocation9 [shape = 'u8[2048]{0}', space=vmem, size = 0x800, scoped, tag = 'output window, operand 0, single buffered']
    %7 = vsyncpa [#allocation5], 0
    %8 = vsyncpa [#allocation8], 0
    %9 = vsyncpa [#allocation6], 0
    // Predicated region
    $region2: #{tpu_custom_call.1} parent=1 // pred_check
      _
    $region3: #{tpu_custom_call.1} parent=1 // pred_check_branch
      %11 = sbr.rel (0) target = $region5
    $region4: #{tpu_custom_call.1} parent=1 // pred_region
      %13 = vsyncadd [#allocation5], 0
      %s14 = sshll.u32 %s0, 4
      %s15 = int_to_ptr.hbm [resolvable:$true] %s14
      %s16 = sshll.u32 [#allocation4], 4
      %s17 = int_to_ptr.vmem [resolvable:$true] %s16
      %22 = dma.hbm_to_vmem [thread:$0]  %s15, 6272, %s17, [#allocation5], 128, 128, 8
    $region5: #{tpu_custom_call.1} parent=1 // pred_fallthru
      _
    // Predicated region
    $region6: #{tpu_custom_call.1} parent=1 // pred_check
      _
    $region7: #{tpu_custom_call.1} parent=1 // pred_check_branch
      %24 = sbr.rel (0) target = $region9
    $region8: #{tpu_custom_call.1} parent=1 // pred_region
      %26 = vsyncadd [#allocation8], 0
      %s27 = sshll.u32 %s1, 4
      %s28 = int_to_ptr.hbm [resolvable:$true] %s27
      %s29 = sshll.u32 [#allocation7], 4
      %s30 = int_to_ptr.vmem [resolvable:$true] %s29
      %35 = dma.hbm_to_vmem [thread:$0]  %s28, 256, %s30, [#allocation8], 128, 128, 8
    $region9: #{tpu_custom_call.1} parent=1 // pred_fallthru
      _
    // Predicated region
    $region10: #{tpu_custom_call.1} parent=1 // pred_check
      _
    $region11: #{tpu_custom_call.1} parent=1 // pred_check_branch
      %37 = sbr.rel (0) target = $region13
    $region12: #{tpu_custom_call.1} parent=1 // pred_region
      %39 = dma.done [#allocation5], 6272
    $region13: #{tpu_custom_call.1} parent=1 // pred_fallthru
      _
    // Predicated region
    $region14: #{tpu_custom_call.1} parent=1 // pred_check
      _
    $region15: #{tpu_custom_call.1} parent=1 // pred_check_branch
      %41 = sbr.rel (0) target = $region17
    $region16: #{tpu_custom_call.1} parent=1 // pred_region
      %43 = dma.done [#allocation8], 256
    $region17: #{tpu_custom_call.1} parent=1 // pred_fallthru
      _
    %v44 = vld [vmem:[#allocation7] sm:$0xff]
    %v45 = vld [vmem:[#allocation7 + $0x8] sm:$0xff]
    %48 = vst [vmem:[#allocation1] ss:$2 sm:$0xff] %v44
    %v49 = vld.sshfl [vmem:[#allocation1] sm:$0xff pattern:$0x75316420]
    %v50 = vld.sshfl [vmem:[#allocation1 + $0x8] sm:$0xff pattern:$0x75316420]
    %s51 = scalar_lea.vmem [#allocation1], 16
    %52 = vst [vmem:[%s51] ss:$2 sm:$0xff] %v45
    %v53 = vld.sshfl [vmem:[#allocation1 + $0x10] sm:$0xff pattern:$0x75316420]
    %v54 = vld.sshfl [vmem:[#allocation1 + $0x18] sm:$0xff pattern:$0x75316420]
    %vm59 = vcmask 1043456
    %v60 = vsel %vm59, %v49, 0.0
    %v61 = vrot.slane %v60, 4
    %v62 = vadd.f32 %v60, %v61
    %v63 = vrot.slane %v62, 2
    %v64 = vadd.f32 %v62, %v63
    %v65 = vrot.slane %v64, 1
    %v66 = vadd.f32 %v64, %v65
    %v67 = vsel %vm59, %v50, 0.0
    %v68 = vrot.slane %v67, 4
    %v69 = vadd.f32 %v67, %v68
    %v70 = vrot.slane %v69, 2
    %v71 = vadd.f32 %v69, %v70
    %v72 = vrot.slane %v71, 1
    %v73 = vadd.f32 %v71, %v72
    %v74 = vsel %vm59, %v53, 0.0
    %v75 = vrot.slane %v74, 4
    %v76 = vadd.f32 %v74, %v75
    %v77 = vrot.slane %v76, 2
    %v78 = vadd.f32 %v76, %v77
    %v79 = vrot.slane %v78, 1
    %v80 = vadd.f32 %v78, %v79
    %v81 = vsel %vm59, %v54, 0.0
    %v82 = vrot.slane %v81, 4
    %v83 = vadd.f32 %v81, %v82
    %v84 = vrot.slane %v83, 2
    %v85 = vadd.f32 %v83, %v84
    %v86 = vrot.slane %v85, 1
    %v87 = vadd.f32 %v85, %v86
    %88 = vst [vmem:[#allocation1] ss:$2 sm:$0xff] %v44
    %v89 = vld.sshfl [vmem:[#allocation1] sm:$0xff pattern:$0x75316420]
    %v90 = vld.sshfl [vmem:[#allocation1 + $0x8] sm:$0xff pattern:$0x75316420]
    %s91 = scalar_lea.vmem [#allocation1], 16
    %92 = vst [vmem:[%s91] ss:$2 sm:$0xff] %v45
    %v93 = vld.sshfl [vmem:[#allocation1 + $0x10] sm:$0xff pattern:$0x75316420]
    %v94 = vld.sshfl [vmem:[#allocation1 + $0x18] sm:$0xff pattern:$0x75316420]
    %v99 = vsel %vm59, %v89, -inf
    %v100 = vrot.slane %v99, 4
    %v101 = vmax.f32 %v99, %v100
    %v102 = vrot.slane %v101, 2
    %v103 = vmax.f32 %v101, %v102
    %v104 = vrot.slane %v103, 1
    %v105 = vmax.f32 %v103, %v104
    %v106 = vsel %vm59, %v90, -inf
    %v107 = vrot.slane %v106, 4
    %v108 = vmax.f32 %v106, %v107
    %v109 = vrot.slane %v108, 2
    %v110 = vmax.f32 %v108, %v109
    %v111 = vrot.slane %v110, 1
    %v112 = vmax.f32 %v110, %v111
    %v113 = vsel %vm59, %v93, -inf
    %v114 = vrot.slane %v113, 4
    %v115 = vmax.f32 %v113, %v114
    %v116 = vrot.slane %v115, 2
    %v117 = vmax.f32 %v115, %v116
    %v118 = vrot.slane %v117, 1
    %v119 = vmax.f32 %v117, %v118
    %v120 = vsel %vm59, %v94, -inf
    %v121 = vrot.slane %v120, 4
    %v122 = vmax.f32 %v120, %v121
    %v123 = vrot.slane %v122, 2
    %v124 = vmax.f32 %v122, %v123
    %v125 = vrot.slane %v124, 1
    %v126 = vmax.f32 %v124, %v125
    %p127 = scmp.eq.s32.totalorder 0, 0
    // Predicated region
    $region18: #{tpu_custom_call.1} parent=1 // pred_check
      %p128 = pneg %p127
    $region19: #{tpu_custom_call.1} parent=1 // pred_check_branch
      %130 = sbr.rel (%p128) target = $region21
    $region20: #{tpu_custom_call.1} parent=1 // pred_region
      %v135 = vrot.slane %v73, 6
      %v136 = vrot.slane %v87, 6
      %vm137 = vcmask 1041408
      %v138 = vsel %vm137, %v66, %v135
      %v139 = vsel %vm137, %v80, %v136
      %vm140 = vcmask 1044484
      %v141 = vsel %vm140, %v138, %v138
      %vm142 = vcmask 1046534
      %v143 = vsel %vm142, %v138, %v141
      %v144 = vrot.slane %v139, 7
      %vm145 = vcmask 1041409
      %v146 = vsel %vm145, %v144, %v143
      %vm147 = vcmask 1043459
      %v148 = vsel %vm147, %v144, %v146
      %vm149 = vcmask 1045509
      %v150 = vsel %vm149, %v144, %v148
      %vm151 = vcmask 1047559
      %v152 = vsel %vm151, %v144, %v150
      %154 = vst [vmem:[#allocation2] sm:$0xf] %v152
      %v159 = vrot.slane %v112, 6
      %v160 = vrot.slane %v126, 6
      %v161 = vsel %vm137, %v105, %v159
      %v162 = vsel %vm137, %v119, %v160
      %v163 = vsel %vm140, %v161, %v161
      %v164 = vsel %vm142, %v161, %v163
      %v165 = vrot.slane %v162, 7
      %v166 = vsel %vm145, %v165, %v164
      %v167 = vsel %vm147, %v165, %v166
      %v168 = vsel %vm149, %v165, %v167
      %v169 = vsel %vm151, %v165, %v168
      %171 = vst [vmem:[#allocation3] sm:$0xf] %v169
    $region21: #{tpu_custom_call.1} parent=1 // pred_fallthru
      _
    %p172 = scmp.gt.s32.totalorder 0, 0
    // Predicated region
    $region22: #{tpu_custom_call.1} parent=1 // pred_check
      %p173 = pneg %p172
    $region23: #{tpu_custom_call.1} parent=1 // pred_check_branch
      %175 = sbr.rel (%p173) target = $region25
    $region24: #{tpu_custom_call.1} parent=1 // pred_region
      %v176 = vld [vmem:[#allocation2] sm:$0xf]
      %v181 = vrot.slane %v73, 6
      %v182 = vrot.slane %v87, 6
      %vm183 = vcmask 1041408
      %v184 = vsel %vm183, %v66, %v181
      %v185 = vsel %vm183, %v80, %v182
      %vm186 = vcmask 1044484
      %v187 = vsel %vm186, %v184, %v184
      %vm188 = vcmask 1046534
      %v189 = vsel %vm188, %v184, %v187
      %v190 = vrot.slane %v185, 7
      %vm191 = vcmask 1041409
      %v192 = vsel %vm191, %v190, %v189
      %vm193 = vcmask 1043459
      %v194 = vsel %vm193, %v190, %v192
      %vm195 = vcmask 1045509
      %v196 = vsel %vm195, %v190, %v194
      %vm197 = vcmask 1047559
      %v198 = vsel %vm197, %v190, %v196
      %v200 = vadd.f32 %v176, %v198
      %201 = vst [vmem:[#allocation2] sm:$0xf] %v200
      %v202 = vld [vmem:[#allocation3] sm:$0xf]
      %v207 = vrot.slane %v112, 6
      %v208 = vrot.slane %v126, 6
      %v209 = vsel %vm183, %v105, %v207
      %v210 = vsel %vm183, %v119, %v208
      %v211 = vsel %vm186, %v209, %v209
      %v212 = vsel %vm188, %v209, %v211
      %v213 = vrot.slane %v210, 7
      %v214 = vsel %vm191, %v213, %v212
      %v215 = vsel %vm193, %v213, %v214
      %v216 = vsel %vm195, %v213, %v215
      %v217 = vsel %vm197, %v213, %v216
      %v219 = vmax.f32 %v202, %v217
      %220 = vst [vmem:[#allocation3] sm:$0xf] %v219
    $region25: #{tpu_custom_call.1} parent=1 // pred_fallthru
      _
    // Predicated region
    $region26: #{tpu_custom_call.1} parent=1 // pred_check
      %p221 = pneg %p127
    $region27: #{tpu_custom_call.1} parent=1 // pred_check_branch
      %223 = sbr.rel (%p221) target = $region29
    $region28: #{tpu_custom_call.1} parent=1 // pred_region
      %v224 = vld [vmem:[#allocation2] sm:$0xf]
      %v225 = vmul.f32 %v224, 0.25
      %v226 = vld [vmem:[#allocation3] sm:$0xf]
      %228 = vst [vmem:[#allocation1] ss:$4 sm:$0xff] %v225
      %v229 = vld.sshfl [vmem:[#allocation1] sm:$0xff pattern:$0x73625140]
      %v230 = vld.sshfl [vmem:[#allocation1 + $0x8] sm:$0xff pattern:$0x73625140]
      %s234 = scalar_lea.vmem [#allocation1], 1
      %235 = vst [vmem:[%s234] ss:$4 sm:$0xff] %v226
      %v236 = vld.sshfl [vmem:[#allocation1] sm:$0xff pattern:$0x73625140]
      %v237 = vld.sshfl [vmem:[#allocation1 + $0x8] sm:$0xff pattern:$0x73625140]
      %vm240 = vcmask 1041408
      %v241 = vsel %vm240, %v229, %v236
      %v242 = vsel %vm240, %v230, %v237
      %243 = vrot.lane.b32.xlu0 %v241, 51
      %v244 = vpop.permute.xlu0 %243
      %245 = vrot.lane.b32.xlu0 %v242, 51
      %v246 = vpop.permute.xlu0 %245
      %v247 = vlaneseq
      %v248 = vand.u32 %v247, 127
      %vm249 = vcmp.lt.s32.totalorder %v248, 51
      %v250 = vsel %vm249, %v244, %v246
      %v251 = vsel %vm249, %v246, %v244
      %v252 = vld [vmem:[#allocation4] sm:$0xff]
      %v255 = vrot.slane %v250, 4
      %v256 = vsel %vm59, %v251, %v255
      %v258 = vmul.f32 %v252, %v256
      %v259 = vadd.f32 %v258, 0.0
      %260 = vrot.lane.b32.xlu0 %v241, 50
      %v261 = vpop.permute.xlu0 %260
      %262 = vrot.lane.b32.xlu0 %v242, 50
      %v263 = vpop.permute.xlu0 %262
      %vm264 = vcmp.lt.s32.totalorder %v248, 50
      %v265 = vsel %vm264, %v261, %v263
      %v266 = vsel %vm264, %v263, %v261
      %s267 = scalar_lea.vmem [#allocation4], 8
      %v268 = vld [vmem:[%s267] sm:$0xff]
      %v271 = vrot.slane %v265, 4
      %v272 = vsel %vm59, %v266, %v271
      %v274 = vmul.f32 %v268, %v272
      %v275 = vadd.f32 %v274, 0.0
      %276 = vrot.lane.b32.xlu0 %v241, 49
      %v277 = vpop.permute.xlu0 %276
      %278 = vrot.lane.b32.xlu0 %v242, 49
      %v279 = vpop.permute.xlu0 %278
      %vm280 = vcmp.lt.s32.totalorder %v248, 49
      %v281 = vsel %vm280, %v277, %v279
      %v282 = vsel %vm280, %v279, %v277
      %s283 = scalar_lea.vmem [#allocation4], 16
      %v284 = vld [vmem:[%s283] sm:$0xff]
      %v287 = vrot.slane %v281, 4
      %v288 = vsel %vm59, %v282, %v287
      %v290 = vmul.f32 %v284, %v288
      %v291 = vadd.f32 %v290, 0.0
      %292 = vrot.lane.b32.xlu0 %v241, 48
      %v293 = vpop.permute.xlu0 %292
      %294 = vrot.lane.b32.xlu0 %v242, 48
      %v295 = vpop.permute.xlu0 %294
      %vm296 = vcmp.lt.s32.totalorder %v248, 48
      %v297 = vsel %vm296, %v293, %v295
      %v298 = vsel %vm296, %v295, %v293
      %s299 = scalar_lea.vmem [#allocation4], 24
      %v300 = vld [vmem:[%s299] sm:$0xff]
      %v303 = vrot.slane %v297, 4
      %v304 = vsel %vm59, %v298, %v303
      %v306 = vmul.f32 %v300, %v304
      %v307 = vadd.f32 %v306, 0.0
      %308 = vrot.lane.b32.xlu0 %v241, 47
      %v309 = vpop.permute.xlu0 %308
      %310 = vrot.lane.b32.xlu0 %v242, 47
      %v311 = vpop.permute.xlu0 %310
      %vm312 = vcmp.lt.s32.totalorder %v248, 47
      %v313 = vsel %vm312, %v309, %v311
      %v314 = vsel %vm312, %v311, %v309
      %s315 = scalar_lea.vmem [#allocation4], 32
      %v316 = vld [vmem:[%s315] sm:$0xff]
      %v319 = vrot.slane %v313, 4
      %v320 = vsel %vm59, %v314, %v319
      %v322 = vmul.f32 %v316, %v320
      %v323 = vadd.f32 %v259, %v322
      %324 = vrot.lane.b32.xlu0 %v241, 46
      %v325 = vpop.permute.xlu0 %324
      %326 = vrot.lane.b32.xlu0 %v242, 46
      %v327 = vpop.permute.xlu0 %326
      %vm328 = vcmp.lt.s32.totalorder %v248, 46
      %v329 = vsel %vm328, %v325, %v327
      %v330 = vsel %vm328, %v327, %v325
      %s331 = scalar_lea.vmem [#allocation4], 40
      %v332 = vld [vmem:[%s331] sm:$0xff]
      %v335 = vrot.slane %v329, 4
      %v336 = vsel %vm59, %v330, %v335
      %v338 = vmul.f32 %v332, %v336
      %v339 = vadd.f32 %v275, %v338
      %340 = vrot.lane.b32.xlu0 %v241, 45
      %v341 = vpop.permute.xlu0 %340
      %342 = vrot.lane.b32.xlu0 %v242, 45
      %v343 = vpop.permute.xlu0 %342
      %vm344 = vcmp.lt.s32.totalorder %v248, 45
      %v345 = vsel %vm344, %v341, %v343
      %v346 = vsel %vm344, %v343, %v341
      %s347 = scalar_lea.vmem [#allocation4], 48
      %v348 = vld [vmem:[%s347] sm:$0xff]
      %v351 = vrot.slane %v345, 4
      %v352 = vsel %vm59, %v346, %v351
      %v354 = vmul.f32 %v348, %v352
      %v355 = vadd.f32 %v291, %v354
      %356 = vrot.lane.b32.xlu0 %v241, 35
      %v357 = vpop.permute.xlu0 %356
      %358 = vrot.lane.b32.xlu0 %v242, 35
      %v359 = vpop.permute.xlu0 %358
      %vm360 = vcmp.lt.s32.totalorder %v248, 35
      %v361 = vsel %vm360, %v357, %v359
      %v362 = vsel %vm360, %v359, %v357
      %s363 = scalar_lea.vmem [#allocation4], 56
      %v364 = vld [vmem:[%s363] sm:$0xff]
      %v367 = vrot.slane %v361, 4
      %v368 = vsel %vm59, %v362, %v367
      %v370 = vmul.f32 %v364, %v368
      %v371 = vadd.f32 %v307, %v370
      %372 = vrot.lane.b32.xlu0 %v241, 34
      %v373 = vpop.permute.xlu0 %372
      %374 = vrot.lane.b32.xlu0 %v242, 34
      %v375 = vpop.permute.xlu0 %374
      %vm376 = vcmp.lt.s32.totalorder %v248, 34
      %v377 = vsel %vm376, %v373, %v375
      %v378 = vsel %vm376, %v375, %v373
      %s379 = scalar_lea.vmem [#allocation4], 64
      %v380 = vld [vmem:[%s379] sm:$0xff]
      %v383 = vrot.slane %v377, 4
      %v384 = vsel %vm59, %v378, %v383
      %v386 = vmul.f32 %v380, %v384
      %v387 = vadd.f32 %v323, %v386
      %388 = vrot.lane.b32.xlu0 %v241, 33
      %v389 = vpop.permute.xlu0 %388
      %390 = vrot.lane.b32.xlu0 %v242, 33
      %v391 = vpop.permute.xlu0 %390
      %vm392 = vcmp.lt.s32.totalorder %v248, 33
      %v393 = vsel %vm392, %v389, %v391
      %v394 = vsel %vm392, %v391, %v389
      %s395 = scalar_lea.vmem [#allocation4], 72
      %v396 = vld [vmem:[%s395] sm:$0xff]
      %v399 = vrot.slane %v393, 4
      %v400 = vsel %vm59, %v394, %v399
      %v402 = vmul.f32 %v396, %v400
      %v403 = vadd.f32 %v339, %v402
      %404 = vrot.lane.b32.xlu0 %v241, 32
      %v405 = vpop.permute.xlu0 %404
      %406 = vrot.lane.b32.xlu0 %v242, 32
      %v407 = vpop.permute.xlu0 %406
      %vm408 = vcmp.lt.s32.totalorder %v248, 32
      %v409 = vsel %vm408, %v405, %v407
      %v410 = vsel %vm408, %v407, %v405
      %s411 = scalar_lea.vmem [#allocation4], 80
      %v412 = vld [vmem:[%s411] sm:$0xff]
      %v415 = vrot.slane %v409, 4
      %v416 = vsel %vm59, %v410, %v415
      %v418 = vmul.f32 %v412, %v416
      %v419 = vadd.f32 %v355, %v418
      %420 = vrot.lane.b32.xlu0 %v241, 31
      %v421 = vpop.permute.xlu0 %420
      %422 = vrot.lane.b32.xlu0 %v242, 31
      %v423 = vpop.permute.xlu0 %422
      %vm424 = vcmp.lt.s32.totalorder %v248, 31
      %v425 = vsel %vm424, %v421, %v423
      %v426 = vsel %vm424, %v423, %v421
      %s427 = scalar_lea.vmem [#allocation4], 88
      %v428 = vld [vmem:[%s427] sm:$0xff]
      %v431 = vrot.slane %v425, 4
      %v432 = vsel %vm59, %v426, %v431
      %v434 = vmul.f32 %v428, %v432
      %v435 = vadd.f32 %v371, %v434
      %436 = vrot.lane.b32.xlu0 %v241, 30
      %v437 = vpop.permute.xlu0 %436
      %438 = vrot.lane.b32.xlu0 %v242, 30
      %v439 = vpop.permute.xlu0 %438
      %vm440 = vcmp.lt.s32.totalorder %v248, 30
      %v441 = vsel %vm440, %v437, %v439
      %v442 = vsel %vm440, %v439, %v437
      %s443 = scalar_lea.vmem [#allocation4], 96
      %v444 = vld [vmem:[%s443] sm:$0xff]
      %v447 = vrot.slane %v441, 4
      %v448 = vsel %vm59, %v442, %v447
      %v450 = vmul.f32 %v444, %v448
      %v451 = vadd.f32 %v387, %v450
      %452 = vrot.lane.b32.xlu0 %v241, 29
      %v453 = vpop.permute.xlu0 %452
      %454 = vrot.lane.b32.xlu0 %v242, 29
      %v455 = vpop.permute.xlu0 %454
      %vm456 = vcmp.lt.s32.totalorder %v248, 29
      %v457 = vsel %vm456, %v453, %v455
      %v458 = vsel %vm456, %v455, %v453
      %s459 = scalar_lea.vmem [#allocation4], 104
      %v460 = vld [vmem:[%s459] sm:$0xff]
      %v463 = vrot.slane %v457, 4
      %v464 = vsel %vm59, %v458, %v463
      %v466 = vmul.f32 %v460, %v464
      %v467 = vadd.f32 %v403, %v466
      %468 = vrot.lane.b32.xlu0 %v241, 19
      %v469 = vpop.permute.xlu0 %468
      %470 = vrot.lane.b32.xlu0 %v242, 19
      %v471 = vpop.permute.xlu0 %470
      %vm472 = vcmp.lt.s32.totalorder %v248, 19
      %v473 = vsel %vm472, %v469, %v471
      %v474 = vsel %vm472, %v471, %v469
      %s475 = scalar_lea.vmem [#allocation4], 112
      %v476 = vld [vmem:[%s475] sm:$0xff]
      %v479 = vrot.slane %v473, 4
      %v480 = vsel %vm59, %v474, %v479
      %v482 = vmul.f32 %v476, %v480
      %v483 = vadd.f32 %v419, %v482
      %484 = vrot.lane.b32.xlu0 %v241, 18
      %v485 = vpop.permute.xlu0 %484
      %486 = vrot.lane.b32.xlu0 %v242, 18
      %v487 = vpop.permute.xlu0 %486
      %vm488 = vcmp.lt.s32.totalorder %v248, 18
      %v489 = vsel %vm488, %v485, %v487
      %v490 = vsel %vm488, %v487, %v485
      %s491 = scalar_lea.vmem [#allocation4], 120
      %v492 = vld [vmem:[%s491] sm:$0xff]
      %v495 = vrot.slane %v489, 4
      %v496 = vsel %vm59, %v490, %v495
      %v498 = vmul.f32 %v492, %v496
      %v499 = vadd.f32 %v435, %v498
      %500 = vrot.lane.b32.xlu0 %v241, 17
      %v501 = vpop.permute.xlu0 %500
      %502 = vrot.lane.b32.xlu0 %v242, 17
      %v503 = vpop.permute.xlu0 %502
      %vm504 = vcmp.lt.s32.totalorder %v248, 17
      %v505 = vsel %vm504, %v501, %v503
      %v506 = vsel %vm504, %v503, %v501
      %s507 = scalar_lea.vmem [#allocation4], 128
      %v508 = vld [vmem:[%s507] sm:$0xff]
      %v511 = vrot.slane %v505, 4
      %v512 = vsel %vm59, %v506, %v511
      %v514 = vmul.f32 %v508, %v512
      %v515 = vadd.f32 %v451, %v514
      %516 = vrot.lane.b32.xlu0 %v241, 16
      %v517 = vpop.permute.xlu0 %516
      %518 = vrot.lane.b32.xlu0 %v242, 16
      %v519 = vpop.permute.xlu0 %518
      %vm520 = vcmp.lt.s32.totalorder %v248, 16
      %v521 = vsel %vm520, %v517, %v519
      %v522 = vsel %vm520, %v519, %v517
      %s523 = scalar_lea.vmem [#allocation4], 136
      %v524 = vld [vmem:[%s523] sm:$0xff]
      %v527 = vrot.slane %v521, 4
      %v528 = vsel %vm59, %v522, %v527
      %v530 = vmul.f32 %v524, %v528
      %v531 = vadd.f32 %v467, %v530
      %532 = vrot.lane.b32.xlu0 %v241, 15
      %v533 = vpop.permute.xlu0 %532
      %534 = vrot.lane.b32.xlu0 %v242, 15
      %v535 = vpop.permute.xlu0 %534
      %vm536 = vcmp.lt.s32.totalorder %v248, 15
      %v537 = vsel %vm536, %v533, %v535
      %v538 = vsel %vm536, %v535, %v533
      %s539 = scalar_lea.vmem [#allocation4], 144
      %v540 = vld [vmem:[%s539] sm:$0xff]
      %v543 = vrot.slane %v537, 4
      %v544 = vsel %vm59, %v538, %v543
      %v546 = vmul.f32 %v540, %v544
      %v547 = vadd.f32 %v483, %v546
      %548 = vrot.lane.b32.xlu0 %v241, 14
      %v549 = vpop.permute.xlu0 %548
      %550 = vrot.lane.b32.xlu0 %v242, 14
      %v551 = vpop.permute.xlu0 %550
      %vm552 = vcmp.lt.s32.totalorder %v248, 14
      %v553 = vsel %vm552, %v549, %v551
      %v554 = vsel %vm552, %v551, %v549
      %s555 = scalar_lea.vmem [#allocation4], 152
      %v556 = vld [vmem:[%s555] sm:$0xff]
      %v559 = vrot.slane %v553, 4
      %v560 = vsel %vm59, %v554, %v559
      %v562 = vmul.f32 %v556, %v560
      %v563 = vadd.f32 %v499, %v562
      %564 = vrot.lane.b32.xlu0 %v241, 13
      %v565 = vpop.permute.xlu0 %564
      %566 = vrot.lane.b32.xlu0 %v242, 13
      %v567 = vpop.permute.xlu0 %566
      %vm568 = vcmp.lt.s32.totalorder %v248, 13
      %v569 = vsel %vm568, %v565, %v567
      %v570 = vsel %vm568, %v567, %v565
      %s571 = scalar_lea.vmem [#allocation4], 160
      %v572 = vld [vmem:[%s571] sm:$0xff]
      %v575 = vrot.slane %v569, 4
      %v576 = vsel %vm59, %v570, %v575
      %v578 = vmul.f32 %v572, %v576
      %v579 = vadd.f32 %v515, %v578
      %580 = vrot.lane.b32.xlu0 %v241, 3
      %v581 = vpop.permute.xlu0 %580
      %582 = vrot.lane.b32.xlu0 %v242, 3
      %v583 = vpop.permute.xlu0 %582
      %vm584 = vcmp.lt.s32.totalorder %v248, 3
      %v585 = vsel %vm584, %v581, %v583
      %v586 = vsel %vm584, %v583, %v581
      %s587 = scalar_lea.vmem [#allocation4], 168
      %v588 = vld [vmem:[%s587] sm:$0xff]
      %v591 = vrot.slane %v585, 4
      %v592 = vsel %vm59, %v586, %v591
      %v594 = vmul.f32 %v588, %v592
      %v595 = vadd.f32 %v531, %v594
      %596 = vrot.lane.b32.xlu0 %v241, 2
      %v597 = vpop.permute.xlu0 %596
      %598 = vrot.lane.b32.xlu0 %v242, 2
      %v599 = vpop.permute.xlu0 %598
      %vm600 = vcmp.lt.s32.totalorder %v248, 2
      %v601 = vsel %vm600, %v597, %v599
      %v602 = vsel %vm600, %v599, %v597
      %s603 = scalar_lea.vmem [#allocation4], 176
      %v604 = vld [vmem:[%s603] sm:$0xff]
      %v607 = vrot.slane %v601, 4
      %v608 = vsel %vm59, %v602, %v607
      %v610 = vmul.f32 %v604, %v608
      %v611 = vadd.f32 %v547, %v610
      %612 = vrot.lane.b32.xlu0 %v241, 1
      %v613 = vpop.permute.xlu0 %612
      %614 = vrot.lane.b32.xlu0 %v242, 1
      %v615 = vpop.permute.xlu0 %614
      %vm616 = vcmp.lt.s32.totalorder %v248, 1
      %v617 = vsel %vm616, %v613, %v615
      %v618 = vsel %vm616, %v615, %v613
      %s619 = scalar_lea.vmem [#allocation4], 184
      %v620 = vld [vmem:[%s619] sm:$0xff]
      %v623 = vrot.slane %v617, 4
      %v624 = vsel %vm59, %v618, %v623
      %v626 = vmul.f32 %v620, %v624
      %v627 = vadd.f32 %v563, %v626
      %s628 = scalar_lea.vmem [#allocation4], 192
      %v629 = vld [vmem:[%s628] sm:$0xff]
      %v632 = vrot.slane %v242, 4
      %v633 = vsel %vm59, %v241, %v632
      %v635 = vmul.f32 %v629, %v633
      %v636 = vadd.f32 %v579, %v635
      %637 = vrot.lane.b32.xlu0 %v241, 127
      %v638 = vpop.permute.xlu0 %637
      %639 = vrot.lane.b32.xlu0 %v242, 127
      %v640 = vpop.permute.xlu0 %639
      %vm641 = vcmp.lt.s32.totalorder %v248, 127
      %v642 = vsel %vm641, %v638, %v640
      %v643 = vsel %vm641, %v640, %v638
      %s644 = scalar_lea.vmem [#allocation4], 200
      %v645 = vld [vmem:[%s644] sm:$0xff]
      %v648 = vrot.slane %v643, 4
      %v649 = vsel %vm59, %v642, %v648
      %v651 = vmul.f32 %v645, %v649
      %v652 = vadd.f32 %v595, %v651
      %653 = vrot.lane.b32.xlu0 %v241, 126
      %v654 = vpop.permute.xlu0 %653
      %655 = vrot.lane.b32.xlu0 %v242, 126
      %v656 = vpop.permute.xlu0 %655
      %vm657 = vcmp.lt.s32.totalorder %v248, 126
      %v658 = vsel %vm657, %v654, %v656
      %v659 = vsel %vm657, %v656, %v654
      %s660 = scalar_lea.vmem [#allocation4], 208
      %v661 = vld [vmem:[%s660] sm:$0xff]
      %v664 = vrot.slane %v659, 4
      %v665 = vsel %vm59, %v658, %v664
      %v667 = vmul.f32 %v661, %v665
      %v668 = vadd.f32 %v611, %v667
      %669 = vrot.lane.b32.xlu0 %v241, 125
      %v670 = vpop.permute.xlu0 %669
      %671 = vrot.lane.b32.xlu0 %v242, 125
      %v672 = vpop.permute.xlu0 %671
      %vm673 = vcmp.lt.s32.totalorder %v248, 125
      %v674 = vsel %vm673, %v670, %v672
      %v675 = vsel %vm673, %v672, %v670
      %s676 = scalar_lea.vmem [#allocation4], 216
      %v677 = vld [vmem:[%s676] sm:$0xff]
      %v680 = vrot.slane %v675, 4
      %v681 = vsel %vm59, %v674, %v680
      %v683 = vmul.f32 %v677, %v681
      %v684 = vadd.f32 %v627, %v683
      %685 = vrot.lane.b32.xlu0 %v241, 115
      %v686 = vpop.permute.xlu0 %685
      %687 = vrot.lane.b32.xlu0 %v242, 115
      %v688 = vpop.permute.xlu0 %687
      %vm689 = vcmp.lt.s32.totalorder %v248, 115
      %v690 = vsel %vm689, %v686, %v688
      %v691 = vsel %vm689, %v688, %v686
      %s692 = scalar_lea.vmem [#allocation4], 224
      %v693 = vld [vmem:[%s692] sm:$0xff]
      %v696 = vrot.slane %v691, 4
      %v697 = vsel %vm59, %v690, %v696
      %v699 = vmul.f32 %v693, %v697
      %v700 = vadd.f32 %v636, %v699
      %701 = vrot.lane.b32.xlu0 %v241, 114
      %v702 = vpop.permute.xlu0 %701
      %703 = vrot.lane.b32.xlu0 %v242, 114
      %v704 = vpop.permute.xlu0 %703
      %vm705 = vcmp.lt.s32.totalorder %v248, 114
      %v706 = vsel %vm705, %v702, %v704
      %v707 = vsel %vm705, %v704, %v702
      %s708 = scalar_lea.vmem [#allocation4], 232
      %v709 = vld [vmem:[%s708] sm:$0xff]
      %v712 = vrot.slane %v707, 4
      %v713 = vsel %vm59, %v706, %v712
      %v715 = vmul.f32 %v709, %v713
      %v716 = vadd.f32 %v652, %v715
      %717 = vrot.lane.b32.xlu0 %v241, 113
      %v718 = vpop.permute.xlu0 %717
      %719 = vrot.lane.b32.xlu0 %v242, 113
      %v720 = vpop.permute.xlu0 %719
      %vm721 = vcmp.lt.s32.totalorder %v248, 113
      %v722 = vsel %vm721, %v718, %v720
      %v723 = vsel %vm721, %v720, %v718
      %s724 = scalar_lea.vmem [#allocation4], 240
      %v725 = vld [vmem:[%s724] sm:$0xff]
      %v728 = vrot.slane %v723, 4
      %v729 = vsel %vm59, %v722, %v728
      %v731 = vmul.f32 %v725, %v729
      %v732 = vadd.f32 %v668, %v731
      %733 = vrot.lane.b32.xlu0 %v241, 112
      %v734 = vpop.permute.xlu0 %733
      %735 = vrot.lane.b32.xlu0 %v242, 112
      %v736 = vpop.permute.xlu0 %735
      %vm737 = vcmp.lt.s32.totalorder %v248, 112
      %v738 = vsel %vm737, %v734, %v736
      %v739 = vsel %vm737, %v736, %v734
      %s740 = scalar_lea.vmem [#allocation4], 248
      %v741 = vld [vmem:[%s740] sm:$0xff]
      %v744 = vrot.slane %v739, 4
      %v745 = vsel %vm59, %v738, %v744
      %v747 = vmul.f32 %v741, %v745
      %v748 = vadd.f32 %v684, %v747
      %749 = vrot.lane.b32.xlu0 %v241, 111
      %v750 = vpop.permute.xlu0 %749
      %751 = vrot.lane.b32.xlu0 %v242, 111
      %v752 = vpop.permute.xlu0 %751
      %vm753 = vcmp.lt.s32.totalorder %v248, 111
      %v754 = vsel %vm753, %v750, %v752
      %v755 = vsel %vm753, %v752, %v750
      %s756 = scalar_lea.vmem [#allocation4], 256
      %v757 = vld [vmem:[%s756] sm:$0xff]
      %v760 = vrot.slane %v755, 4
      %v761 = vsel %vm59, %v754, %v760
      %v763 = vmul.f32 %v757, %v761
      %v764 = vadd.f32 %v700, %v763
      %765 = vrot.lane.b32.xlu0 %v241, 110
      %v766 = vpop.permute.xlu0 %765
      %767 = vrot.lane.b32.xlu0 %v242, 110
      %v768 = vpop.permute.xlu0 %767
      %vm769 = vcmp.lt.s32.totalorder %v248, 110
      %v770 = vsel %vm769, %v766, %v768
      %v771 = vsel %vm769, %v768, %v766
      %s772 = scalar_lea.vmem [#allocation4], 264
      %v773 = vld [vmem:[%s772] sm:$0xff]
      %v776 = vrot.slane %v771, 4
      %v777 = vsel %vm59, %v770, %v776
      %v779 = vmul.f32 %v773, %v777
      %v780 = vadd.f32 %v716, %v779
      %781 = vrot.lane.b32.xlu0 %v241, 109
      %v782 = vpop.permute.xlu0 %781
      %783 = vrot.lane.b32.xlu0 %v242, 109
      %v784 = vpop.permute.xlu0 %783
      %vm785 = vcmp.lt.s32.totalorder %v248, 109
      %v786 = vsel %vm785, %v782, %v784
      %v787 = vsel %vm785, %v784, %v782
      %s788 = scalar_lea.vmem [#allocation4], 272
      %v789 = vld [vmem:[%s788] sm:$0xff]
      %v792 = vrot.slane %v787, 4
      %v793 = vsel %vm59, %v786, %v792
      %v795 = vmul.f32 %v789, %v793
      %v796 = vadd.f32 %v732, %v795
      %797 = vrot.lane.b32.xlu0 %v241, 99
      %v798 = vpop.permute.xlu0 %797
      %799 = vrot.lane.b32.xlu0 %v242, 99
      %v800 = vpop.permute.xlu0 %799
      %vm801 = vcmp.lt.s32.totalorder %v248, 99
      %v802 = vsel %vm801, %v798, %v800
      %v803 = vsel %vm801, %v800, %v798
      %s804 = scalar_lea.vmem [#allocation4], 280
      %v805 = vld [vmem:[%s804] sm:$0xff]
      %v808 = vrot.slane %v803, 4
      %v809 = vsel %vm59, %v802, %v808
      %v811 = vmul.f32 %v805, %v809
      %v812 = vadd.f32 %v748, %v811
      %813 = vrot.lane.b32.xlu0 %v241, 98
      %v814 = vpop.permute.xlu0 %813
      %815 = vrot.lane.b32.xlu0 %v242, 98
      %v816 = vpop.permute.xlu0 %815
      %vm817 = vcmp.lt.s32.totalorder %v248, 98
      %v818 = vsel %vm817, %v814, %v816
      %v819 = vsel %vm817, %v816, %v814
      %s820 = scalar_lea.vmem [#allocation4], 288
      %v821 = vld [vmem:[%s820] sm:$0xff]
      %v824 = vrot.slane %v819, 4
      %v825 = vsel %vm59, %v818, %v824
      %v827 = vmul.f32 %v821, %v825
      %v828 = vadd.f32 %v764, %v827
      %829 = vrot.lane.b32.xlu0 %v241, 97
      %v830 = vpop.permute.xlu0 %829
      %831 = vrot.lane.b32.xlu0 %v242, 97
      %v832 = vpop.permute.xlu0 %831
      %vm833 = vcmp.lt.s32.totalorder %v248, 97
      %v834 = vsel %vm833, %v830, %v832
      %v835 = vsel %vm833, %v832, %v830
      %s836 = scalar_lea.vmem [#allocation4], 296
      %v837 = vld [vmem:[%s836] sm:$0xff]
      %v840 = vrot.slane %v835, 4
      %v841 = vsel %vm59, %v834, %v840
      %v843 = vmul.f32 %v837, %v841
      %v844 = vadd.f32 %v780, %v843
      %845 = vrot.lane.b32.xlu0 %v241, 96
      %v846 = vpop.permute.xlu0 %845
      %847 = vrot.lane.b32.xlu0 %v242, 96
      %v848 = vpop.permute.xlu0 %847
      %vm849 = vcmp.lt.s32.totalorder %v248, 96
      %v850 = vsel %vm849, %v846, %v848
      %v851 = vsel %vm849, %v848, %v846
      %s852 = scalar_lea.vmem [#allocation4], 304
      %v853 = vld [vmem:[%s852] sm:$0xff]
      %v856 = vrot.slane %v851, 4
      %v857 = vsel %vm59, %v850, %v856
      %v859 = vmul.f32 %v853, %v857
      %v860 = vadd.f32 %v796, %v859
      %861 = vrot.lane.b32.xlu0 %v241, 95
      %v862 = vpop.permute.xlu0 %861
      %863 = vrot.lane.b32.xlu0 %v242, 95
      %v864 = vpop.permute.xlu0 %863
      %vm865 = vcmp.lt.s32.totalorder %v248, 95
      %v866 = vsel %vm865, %v862, %v864
      %v867 = vsel %vm865, %v864, %v862
      %s868 = scalar_lea.vmem [#allocation4], 312
      %v869 = vld [vmem:[%s868] sm:$0xff]
      %v872 = vrot.slane %v867, 4
      %v873 = vsel %vm59, %v866, %v872
      %v875 = vmul.f32 %v869, %v873
      %v876 = vadd.f32 %v812, %v875
      %877 = vrot.lane.b32.xlu0 %v241, 94
      %v878 = vpop.permute.xlu0 %877
      %879 = vrot.lane.b32.xlu0 %v242, 94
      %v880 = vpop.permute.xlu0 %879
      %vm881 = vcmp.lt.s32.totalorder %v248, 94
      %v882 = vsel %vm881, %v878, %v880
      %v883 = vsel %vm881, %v880, %v878
      %s884 = scalar_lea.vmem [#allocation4], 320
      %v885 = vld [vmem:[%s884] sm:$0xff]
      %v888 = vrot.slane %v883, 4
      %v889 = vsel %vm59, %v882, %v888
      %v891 = vmul.f32 %v885, %v889
      %v892 = vadd.f32 %v828, %v891
      %893 = vrot.lane.b32.xlu0 %v241, 93
      %v894 = vpop.permute.xlu0 %893
      %895 = vrot.lane.b32.xlu0 %v242, 93
      %v896 = vpop.permute.xlu0 %895
      %vm897 = vcmp.lt.s32.totalorder %v248, 93
      %v898 = vsel %vm897, %v894, %v896
      %v899 = vsel %vm897, %v896, %v894
      %s900 = scalar_lea.vmem [#allocation4], 328
      %v901 = vld [vmem:[%s900] sm:$0xff]
      %v904 = vrot.slane %v899, 4
      %v905 = vsel %vm59, %v898, %v904
      %v907 = vmul.f32 %v901, %v905
      %v908 = vadd.f32 %v844, %v907
      %909 = vrot.lane.b32.xlu0 %v241, 83
      %v910 = vpop.permute.xlu0 %909
      %911 = vrot.lane.b32.xlu0 %v242, 83
      %v912 = vpop.permute.xlu0 %911
      %vm913 = vcmp.lt.s32.totalorder %v248, 83
      %v914 = vsel %vm913, %v910, %v912
      %v915 = vsel %vm913, %v912, %v910
      %s916 = scalar_lea.vmem [#allocation4], 336
      %v917 = vld [vmem:[%s916] sm:$0xff]
      %v920 = vrot.slane %v915, 4
      %v921 = vsel %vm59, %v914, %v920
      %v923 = vmul.f32 %v917, %v921
      %v924 = vadd.f32 %v860, %v923
      %925 = vrot.lane.b32.xlu0 %v241, 82
      %v926 = vpop.permute.xlu0 %925
      %927 = vrot.lane.b32.xlu0 %v242, 82
      %v928 = vpop.permute.xlu0 %927
      %vm929 = vcmp.lt.s32.totalorder %v248, 82
      %v930 = vsel %vm929, %v926, %v928
      %v931 = vsel %vm929, %v928, %v926
      %s932 = scalar_lea.vmem [#allocation4], 344
      %v933 = vld [vmem:[%s932] sm:$0xff]
      %v936 = vrot.slane %v931, 4
      %v937 = vsel %vm59, %v930, %v936
      %v939 = vmul.f32 %v933, %v937
      %v940 = vadd.f32 %v876, %v939
      %941 = vrot.lane.b32.xlu0 %v241, 81
      %v942 = vpop.permute.xlu0 %941
      %943 = vrot.lane.b32.xlu0 %v242, 81
      %v944 = vpop.permute.xlu0 %943
      %vm945 = vcmp.lt.s32.totalorder %v248, 81
      %v946 = vsel %vm945, %v942, %v944
      %v947 = vsel %vm945, %v944, %v942
      %s948 = scalar_lea.vmem [#allocation4], 352
      %v949 = vld [vmem:[%s948] sm:$0xff]
      %v952 = vrot.slane %v947, 4
      %v953 = vsel %vm59, %v946, %v952
      %v955 = vmul.f32 %v949, %v953
      %v956 = vadd.f32 %v892, %v955
      %957 = vrot.lane.b32.xlu0 %v241, 80
      %v958 = vpop.permute.xlu0 %957
      %959 = vrot.lane.b32.xlu0 %v242, 80
      %v960 = vpop.permute.xlu0 %959
      %vm961 = vcmp.lt.s32.totalorder %v248, 80
      %v962 = vsel %vm961, %v958, %v960
      %v963 = vsel %vm961, %v960, %v958
      %s964 = scalar_lea.vmem [#allocation4], 360
      %v965 = vld [vmem:[%s964] sm:$0xff]
      %v968 = vrot.slane %v963, 4
      %v969 = vsel %vm59, %v962, %v968
      %v971 = vmul.f32 %v965, %v969
      %v972 = vadd.f32 %v908, %v971
      %973 = vrot.lane.b32.xlu0 %v241, 79
      %v974 = vpop.permute.xlu0 %973
      %975 = vrot.lane.b32.xlu0 %v242, 79
      %v976 = vpop.permute.xlu0 %975
      %vm977 = vcmp.lt.s32.totalorder %v248, 79
      %v978 = vsel %vm977, %v974, %v976
      %v979 = vsel %vm977, %v976, %v974
      %s980 = scalar_lea.vmem [#allocation4], 368
      %v981 = vld [vmem:[%s980] sm:$0xff]
      %v984 = vrot.slane %v979, 4
      %v985 = vsel %vm59, %v978, %v984
      %v987 = vmul.f32 %v981, %v985
      %v988 = vadd.f32 %v924, %v987
      %989 = vrot.lane.b32.xlu0 %v241, 78
      %v990 = vpop.permute.xlu0 %989
      %991 = vrot.lane.b32.xlu0 %v242, 78
      %v992 = vpop.permute.xlu0 %991
      %vm993 = vcmp.lt.s32.totalorder %v248, 78
      %v994 = vsel %vm993, %v990, %v992
      %v995 = vsel %vm993, %v992, %v990
      %s996 = scalar_lea.vmem [#allocation4], 376
      %v997 = vld [vmem:[%s996] sm:$0xff]
      %v1000 = vrot.slane %v995, 4
      %v1001 = vsel %vm59, %v994, %v1000
      %v1003 = vmul.f32 %v997, %v1001
      %v1004 = vadd.f32 %v940, %v1003
      %1005 = vrot.lane.b32.xlu0 %v241, 77
      %v1006 = vpop.permute.xlu0 %1005
      %1007 = vrot.lane.b32.xlu0 %v242, 77
      %v1008 = vpop.permute.xlu0 %1007
      %vm1009 = vcmp.lt.s32.totalorder %v248, 77
      %v1010 = vsel %vm1009, %v1006, %v1008
      %v1011 = vsel %vm1009, %v1008, %v1006
      %s1012 = scalar_lea.vmem [#allocation4], 384
      %v1013 = vld [vmem:[%s1012] sm:$0xff]
      %v1016 = vrot.slane %v1011, 4
      %v1017 = vsel %vm59, %v1010, %v1016
      %v1019 = vmul.f32 %v1013, %v1017
      %v1020 = vadd.f32 %v956, %v1019
      %v1021 = vadd.f32 %v1020, %v972
      %v1022 = vadd.f32 %v1021, %v988
      %v1023 = vadd.f32 %v1022, %v1004
      %v1025 = vrot.slane %v1023, 6
      %v1026 = vrot.slane %v1025, 4
      %v1028 = vadd.f32 %v1023, %v1026
      %v1029 = vxor.u32 %v1028, 2147483648
      %v1030 = vmul.f32 %v1029, 1.442695
      %v1031 = vpow.pop %v1030
      %v1032 = vadd.f32 %v1031, 1.0
      %v1033 = vrcp.pop %v1032
      %v1034 = vmul.f32 %v1032, %v1033
      %v1035 = vsub.f32 1.0, %v1034
      %v1036 = vmul.f32 %v1033, %v1035
      %v1037 = vadd.f32 %v1033, %v1036
      %vm1038 = vweird.f32 %v1032
      %vm1039 = vweird.f32 %v1033
      %vm1040 = vmor %vm1038, %vm1039
      %v1041 = vsel %vm1040, %v1033, %v1037
      %v1042 = vand.u32 2147483647, %v1032
      %vm1043 = vcmp.eq.f32.partialorder %v1042, 8.507059e+37
      %v1044 = vand.u32 %v1032, 2147483648
      %v1045 = vor.u32 1.1754944e-38, %v1044
      %v1046 = vsel %vm1043, %v1045, %v1041
      %v1047 = vmul.f32 1.0, %v1046
      %v1049 = vrot.slane %v1047, 2
      %v1050 = vsel %vm240, %v1047, %v1049
      %1052 = vst [vmem:[#allocation9] sm:$0xf] %v1050
    $region29: #{tpu_custom_call.1} parent=1 // pred_fallthru
      _
    // Predicated region
    $region30: #{tpu_custom_call.1} parent=1 // pred_check
      _
    $region31: #{tpu_custom_call.1} parent=1 // pred_check_branch
      %1054 = sbr.rel (0) target = $region33
    $region32: #{tpu_custom_call.1} parent=1 // pred_region
      %1056 = vsyncadd [#allocation6], 0
      %s1058 = sshll.u32 [#allocation9], 4
      %s1059 = int_to_ptr.vmem [resolvable:$true] %s1058
      %s1060 = sshll.u32 %s2, 4
      %s1061 = int_to_ptr.hbm [resolvable:$true] %s1060
      %1063 = dma.vmem_to_hbm [thread:$0]  %s1059, 64, %s1061, [#allocation6]
    $region33: #{tpu_custom_call.1} parent=1 // pred_fallthru
      _
    // Predicated region
    $region34: #{tpu_custom_call.1} parent=1 // pred_check
      _
    $region35: #{tpu_custom_call.1} parent=1 // pred_check_branch
      %1065 = sbr.rel (0) target = $region37
    $region36: #{tpu_custom_call.1} parent=1 // pred_region
      %1067 = dma.done [#allocation6], 64
    $region37: #{tpu_custom_call.1} parent=1 // pred_fallthru
      _
    %1068 = vsyncpa [#allocation5], 1
    %1069 = vsyncpa [#allocation8], 1
    %1070 = vsyncpa [#allocation6], 1

</llo_original>
